<compile_context>
chip_gen: v6e
topology: v6e:2x2x1
jax: 0.10.0
libtpu: 0.0.40
codegen_flags: <defaults>
</compile_context>

<pallas_src>
import jax
import jax.numpy as jnp
from jax import lax
from jax.experimental import pallas as pl
from jax.experimental.pallas import tpu as pltpu


# --------------------------------------------------------------------------- #
# Pallas kernels
# --------------------------------------------------------------------------- #
def _conv_stats_kernel(a_ref, x_ref, bw_ref, bias_ref, pool_ref, y_ref, stats_ref):
    """Per-image upsample+conv as MXU matmuls, plus per-image BN partial sums.

    a_ref:    (3, Ho, H)            row-interp matrices (dy taps folded)
    x_ref:    (1, H, Cin*W)         input slab for this n
    bw_ref:   (3, Cin*W, Cout*Wo)   conv weights folded with col-interp / dx taps
    bias_ref: (1, Cout*Wo)          conv bias broadcast to the lane layout
    pool_ref: (Cout*Wo, Cout)       lane -> channel pooling selector
    y_ref:    (1, Ho, Cout*Wo)      conv output slab (lane-dense)
    stats_ref:(1, 2, Cout)          [sum(y), sum(y*y)] per channel for this n
    """
    x = x_ref[0]                                                        # (H, Cin*W)

    m = jnp.dot(a_ref[0], x, preferred_element_type=jnp.float32)       # (Ho, Cin*W)
    acc = jnp.dot(m, bw_ref[0], preferred_element_type=jnp.float32)    # (Ho, Cout*Wo)
    for dy in (1, 2):                                                   # short static unroll
        m = jnp.dot(a_ref[dy], x, preferred_element_type=jnp.float32)
        acc = acc + jnp.dot(m, bw_ref[dy], preferred_element_type=jnp.float32)

    y = acc + bias_ref[...]                                             # (Ho, Cout*Wo)
    y_ref[0] = y

    # Per-channel partial sums via sublane reduce + tiny pooling matmul (no reshapes).
    cols = jnp.concatenate(
        [jnp.sum(y, axis=0, keepdims=True),
         jnp.sum(y * y, axis=0, keepdims=True)], axis=0)                # (2, Cout*Wo)
    stats_ref[0] = jnp.dot(cols, pool_ref[...],
                           preferred_element_type=jnp.float32)          # (2, Cout)


def _bn_relu_kernel(y_ref, scale_ref, shift_ref, o_ref):
    """Lane-dense BN apply + ReLU:  out = max(y*scale + shift, 0)."""
    o_ref[0] = jnp.maximum(y_ref[0] * scale_ref[...] + shift_ref[...], 0.0)


# --------------------------------------------------------------------------- #
# Host-side glue
# --------------------------------------------------------------------------- #
def _bilinear_matrix(in_size, out_size):
    """U (out_size, in_size): bilinear, align_corners=True (matches nn.Upsample)."""
    i = jnp.arange(out_size, dtype=jnp.float32)
    src = i * (in_size - 1) / (out_size - 1)
    i0 = jnp.clip(jnp.floor(src).astype(jnp.int32), 0, in_size - 1)
    i1 = jnp.clip(i0 + 1, 0, in_size - 1)
    frac = src - i0.astype(jnp.float32)
    U = jnp.zeros((out_size, in_size), jnp.float32)
    U = U.at[jnp.arange(out_size), i0].add(1.0 - frac)
    U = U.at[jnp.arange(out_size), i1].add(frac)
    return U


@jax.jit
def upconv_block(x, weight, bias, gamma, beta):
    N, Cin, H, W = x.shape
    Cout = weight.shape[0]
    Ho, Wo = 2 * H, 2 * W
    CinW, CoutWo = Cin * W, Cout * Wo

    x = x.astype(jnp.float32)
    weight = weight.astype(jnp.float32)
    bias = bias.astype(jnp.float32)
    gamma = gamma.astype(jnp.float32)
    beta = beta.astype(jnp.float32)

    # Row interpolation (upsample H) with the 3x3 dy tap shift + zero-pad folded in.
    Uh = _bilinear_matrix(H, Ho)                                          # (Ho, H)
    A0 = jnp.zeros((Ho, H), jnp.float32).at[1:, :].set(Uh[:-1, :])
    A2 = jnp.zeros((Ho, H), jnp.float32).at[:-1, :].set(Uh[1:, :])
    A = jnp.stack([A0, Uh, A2])                                           # (3, Ho, H)

    # Column interpolation with dx tap shift; conv weights folded in host-side:
    # Bw[dy, ci*W + wi, co*Wo + wo] = sum_dx weight[co,ci,dy,dx] * B[dx, wi, wo]
    Uw = _bilinear_matrix(W, Wo).T                                        # (W, Wo)
    B0 = jnp.zeros((W, Wo), jnp.float32).at[:, 1:].set(Uw[:, :-1])
    B2 = jnp.zeros((W, Wo), jnp.float32).at[:, :-1].set(Uw[:, 1:])
    B = jnp.stack([B0, Uw, B2])                                           # (3, W, Wo)
    Bw = jnp.einsum('ocyx,xij->ycioj', weight, B).reshape(3, CinW, CoutWo)

    # Per-image input slab: (H, Cin*W), lane axis ci-major / W-minor.
    x_slab = x.transpose(0, 2, 1, 3).reshape(N, H, CinW)

    bias_row = jnp.repeat(bias, Wo)[None, :]                              # (1, Cout*Wo)
    pool = jnp.zeros((CoutWo, Cout), jnp.float32).at[
        jnp.arange(CoutWo), jnp.arange(CoutWo) // Wo].set(1.0)            # lane -> channel

    # ---- pass 1: upsample + conv + bias + per-image BN partial sums -------- #
    y_slab, stats = pl.pallas_call(
        _conv_stats_kernel,
        out_shape=(jax.ShapeDtypeStruct((N, Ho, CoutWo), jnp.float32),
                   jax.ShapeDtypeStruct((N, 2, Cout), jnp.float32)),
        grid=(N,),
        in_specs=[
            pl.BlockSpec((3, Ho, H), lambda n: (0, 0, 0)),
            pl.BlockSpec((1, H, CinW), lambda n: (n, 0, 0)),
            pl.BlockSpec((3, CinW, CoutWo), lambda n: (0, 0, 0)),
            pl.BlockSpec((1, CoutWo), lambda n: (0, 0)),
            pl.BlockSpec((CoutWo, Cout), lambda n: (0, 0)),
        ],
        out_specs=(
            pl.BlockSpec((1, Ho, CoutWo), lambda n: (n, 0, 0)),
            pl.BlockSpec((1, 2, Cout), lambda n: (n, 0, 0)),
        ),
        compiler_params=pltpu.CompilerParams(dimension_semantics=("parallel",)),
    )(A, x_slab, Bw, bias_row, pool)

    # ---- tiny global BN reduction (train mode, biased variance) in JAX ----- #
    # Note: single-pass E[y^2]-mean^2; adequate here, shifted-sum would be safer
    # for activations with very large mean/std ratios.
    s = jnp.sum(stats, axis=0)                                            # (2, Cout)
    cnt = float(N * Ho * Wo)
    mean = s[0] / cnt
    var = s[1] / cnt - mean * mean
    scale = gamma * lax.rsqrt(var + 1e-5)
    shift = beta - mean * scale
    scale_row = jnp.repeat(scale, Wo)[None, :]                            # (1, Cout*Wo)
    shift_row = jnp.repeat(shift, Wo)[None, :]

    # ---- pass 2: lane-dense BN apply + ReLU --------------------------------- #
    out_slab = pl.pallas_call(
        _bn_relu_kernel,
        out_shape=jax.ShapeDtypeStruct((N, Ho, CoutWo), jnp.float32),
        grid=(N,),
        in_specs=[
            pl.BlockSpec((1, Ho, CoutWo), lambda n: (n, 0, 0)),
            pl.BlockSpec((1, CoutWo), lambda n: (0, 0)),
            pl.BlockSpec((1, CoutWo), lambda n: (0, 0)),
        ],
        out_specs=pl.BlockSpec((1, Ho, CoutWo), lambda n: (n, 0, 0)),
        compiler_params=pltpu.CompilerParams(dimension_semantics=("parallel",)),
    )(y_slab, scale_row, shift_row)

    # Layout plumbing back to NCHW (wrapper-side, keeps the kernel stores lane-dense).
    return out_slab.reshape(N, Ho, Cout, Wo).transpose(0, 2, 1, 3)


# --------------------------------------------------------------------------- #
# Pure-JAX reference (independent of the kernel's matrix formulation)
# --------------------------------------------------------------------------- #
def reference(x, weight, bias, gamma, beta):
    N, C, H, W = x.shape

    def interp1d(arr, axis, out_size):
        in_size = arr.shape[axis]
        pos = jnp.arange(out_size, dtype=jnp.float32) * (in_size - 1) / (out_size - 1)
        i0 = jnp.clip(jnp.floor(pos).astype(jnp.int32), 0, in_size - 1)
        i1 = jnp.clip(i0 + 1, 0, in_size - 1)
        f = pos - i0.astype(jnp.float32)
        a0 = jnp.take(arr, i0, axis=axis)
        a1 = jnp.take(arr, i1, axis=axis)
        shp = [1] * arr.ndim
        shp[axis] = out_size
        f = f.reshape(shp)
        return a0 * (1.0 - f) + a1 * f

    up = interp1d(x, 2, 2 * H)
    up = interp1d(up, 3, 2 * W)
    conv = lax.conv_general_dilated(
        up, weight, window_strides=(1, 1), padding=((1, 1), (1, 1)),
        dimension_numbers=("NCHW", "OIHW", "NCHW"))
    conv = conv + bias[None, :, None, None]
    mean = conv.mean(axis=(0, 2, 3), keepdims=True)
    var = conv.var(axis=(0, 2, 3), keepdims=True)        # biased, like PyTorch train-mode BN
    y = (conv - mean) / jnp.sqrt(var + 1e-5) * gamma[None, :, None, None] \
        + beta[None, :, None, None]
    return jnp.maximum(y, 0.0)


# --------------------------------------------------------------------------- #
if __name__ == "__main__":
    N, Cin, Cout, H, W = 2, 4, 8, 16, 16

    key = jax.random.PRNGKey(0)
    kx, kw, kb, kg, kbeta = jax.random.split(key, 5)
    x = jax.random.normal(kx, (N, Cin, H, W), jnp.float32)
    weight = 0.1 * jax.random.normal(kw, (Cout, Cin, 3, 3), jnp.float32)
    bias = 0.1 * jax.random.normal(kb, (Cout,), jnp.float32)
    gamma = 1.0 + 0.1 * jax.random.normal(kg, (Cout,), jnp.float32)
    beta = 0.1 * jax.random.normal(kbeta, (Cout,), jnp.float32)

    out = upconv_block(x, weight, bias, gamma, beta)
    out = jax.block_until_ready(out)

    ref = jax.block_until_ready(reference(x, weight, bias, gamma, beta))
    assert out.shape == (N, Cout, 2 * H, 2 * W)
    max_err = float(jnp.max(jnp.abs(out - ref)))
    assert max_err < 1e-3, f"mismatch vs reference: {max_err}"

    print("KERNEL_OK")
</pallas_src>

<mosaic_0001>
module attributes {stable_mosaic.version = 11 : i64} {
  func.func private @main(%arg0: i32) attributes {dimension_semantics = [#tpu.dimension_semantics<core_parallel>], iteration_bounds = array<i64: 2>, tpu.core_type = #tpu.core_type<sc_scalar_subcore>, window_params = []} {
    return
  }
}

module attributes {stable_mosaic.version = 11 : i64} {
  func.func private @main(%arg0: i32) attributes {dimension_semantics = [#tpu.dimension_semantics<core_parallel>], iteration_bounds = array<i64: 2>, tpu.core_type = #tpu.core_type<sc_scalar_subcore>, window_params = []} {
    return
  }
}

module attributes {stable_mosaic.version = 11 : i64} {
  func.func @_conv_stats_kernel(%arg0: i32, %arg1: memref<3x32x16xf32, #tpu.memory_space<vmem>>, %arg2: memref<1x16x64xf32, #tpu.memory_space<vmem>>, %arg3: memref<3x64x256xf32, #tpu.memory_space<vmem>>, %arg4: memref<1x256xf32, #tpu.memory_space<vmem>>, %arg5: memref<256x8xf32, #tpu.memory_space<vmem>>, %arg6: memref<1x32x256xf32, #tpu.memory_space<vmem>>, %arg7: memref<1x2x8xf32, #tpu.memory_space<vmem>>) attributes {dimension_semantics = [#tpu.dimension_semantics<parallel>], iteration_bounds = array<i64: 2>, scalar_prefetch = 0 : i64, scratch_operands = 0 : i64, tpu.core_type = #tpu.core_type<tc>, window_params = [{pipeline_mode = #tpu.pipeline_mode<synchronous>, transform_indices = @transform_0, window_bounds = array<i64: 3, 32, 16>}, {transform_indices = @transform_1, window_bounds = array<i64: 1, 16, 64>}, {pipeline_mode = #tpu.pipeline_mode<synchronous>, transform_indices = @transform_2, window_bounds = array<i64: 3, 64, 256>}, {pipeline_mode = #tpu.pipeline_mode<synchronous>, transform_indices = @transform_3, window_bounds = array<i64: 1, 256>}, {pipeline_mode = #tpu.pipeline_mode<synchronous>, transform_indices = @transform_4, window_bounds = array<i64: 256, 8>}, {transform_indices = @transform_5, window_bounds = array<i64: 1, 32, 256>}, {transform_indices = @transform_6, window_bounds = array<i64: 1, 2, 8>}]} {
    %c0 = arith.constant 0 : index
    %c0_0 = arith.constant 0 : index
    %c0_1 = arith.constant 0 : index
    %0 = vector.load %arg2[%c0, %c0_0, %c0_1] : memref<1x16x64xf32, #tpu.memory_space<vmem>>, vector<1x16x64xf32>
    %1 = vector.shape_cast %0 : vector<1x16x64xf32> to vector<16x64xf32>
    %c0_2 = arith.constant 0 : index
    %c0_3 = arith.constant 0 : index
    %c0_4 = arith.constant 0 : index
    %2 = vector.load %arg1[%c0_2, %c0_3, %c0_4] : memref<3x32x16xf32, #tpu.memory_space<vmem>>, vector<1x32x16xf32>
    %3 = vector.shape_cast %2 : vector<1x32x16xf32> to vector<32x16xf32>
    %cst = arith.constant dense<0.000000e+00> : vector<32x64xf32>
    %4 = tpu.matmul %3, %1, %cst {dimension_numbers = #tpu.dot_dimension_numbers<[1], [0], [0], [1], [0, 0, 1, 1], [], []>} : vector<32x16xf32>, vector<16x64xf32>, vector<32x64xf32> -> vector<32x64xf32>
    %c0_5 = arith.constant 0 : index
    %c0_6 = arith.constant 0 : index
    %c0_7 = arith.constant 0 : index
    %5 = vector.load %arg3[%c0_5, %c0_6, %c0_7] : memref<3x64x256xf32, #tpu.memory_space<vmem>>, vector<1x64x256xf32>
    %6 = vector.shape_cast %5 : vector<1x64x256xf32> to vector<64x256xf32>
    %cst_8 = arith.constant dense<0.000000e+00> : vector<32x256xf32>
    %7 = tpu.matmul %4, %6, %cst_8 {dimension_numbers = #tpu.dot_dimension_numbers<[1], [0], [0], [1], [0, 0, 1, 1], [], []>} : vector<32x64xf32>, vector<64x256xf32>, vector<32x256xf32> -> vector<32x256xf32>
    %c1 = arith.constant 1 : index
    %c0_9 = arith.constant 0 : index
    %c0_10 = arith.constant 0 : index
    %8 = vector.load %arg1[%c1, %c0_9, %c0_10] : memref<3x32x16xf32, #tpu.memory_space<vmem>>, vector<1x32x16xf32>
    %9 = vector.shape_cast %8 : vector<1x32x16xf32> to vector<32x16xf32>
    %cst_11 = arith.constant dense<0.000000e+00> : vector<32x64xf32>
    %10 = tpu.matmul %9, %1, %cst_11 {dimension_numbers = #tpu.dot_dimension_numbers<[1], [0], [0], [1], [0, 0, 1, 1], [], []>} : vector<32x16xf32>, vector<16x64xf32>, vector<32x64xf32> -> vector<32x64xf32>
    %c1_12 = arith.constant 1 : index
    %c0_13 = arith.constant 0 : index
    %c0_14 = arith.constant 0 : index
    %11 = vector.load %arg3[%c1_12, %c0_13, %c0_14] : memref<3x64x256xf32, #tpu.memory_space<vmem>>, vector<1x64x256xf32>
    %12 = vector.shape_cast %11 : vector<1x64x256xf32> to vector<64x256xf32>
    %cst_15 = arith.constant dense<0.000000e+00> : vector<32x256xf32>
    %13 = tpu.matmul %10, %12, %cst_15 {dimension_numbers = #tpu.dot_dimension_numbers<[1], [0], [0], [1], [0, 0, 1, 1], [], []>} : vector<32x64xf32>, vector<64x256xf32>, vector<32x256xf32> -> vector<32x256xf32>
    %14 = arith.addf %7, %13 : vector<32x256xf32>
    %c2 = arith.constant 2 : index
    %c0_16 = arith.constant 0 : index
    %c0_17 = arith.constant 0 : index
    %15 = vector.load %arg1[%c2, %c0_16, %c0_17] : memref<3x32x16xf32, #tpu.memory_space<vmem>>, vector<1x32x16xf32>
    %16 = vector.shape_cast %15 : vector<1x32x16xf32> to vector<32x16xf32>
    %cst_18 = arith.constant dense<0.000000e+00> : vector<32x64xf32>
    %17 = tpu.matmul %16, %1, %cst_18 {dimension_numbers = #tpu.dot_dimension_numbers<[1], [0], [0], [1], [0, 0, 1, 1], [], []>} : vector<32x16xf32>, vector<16x64xf32>, vector<32x64xf32> -> vector<32x64xf32>
    %c2_19 = arith.constant 2 : index
    %c0_20 = arith.constant 0 : index
    %c0_21 = arith.constant 0 : index
    %18 = vector.load %arg3[%c2_19, %c0_20, %c0_21] : memref<3x64x256xf32, #tpu.memory_space<vmem>>, vector<1x64x256xf32>
    %19 = vector.shape_cast %18 : vector<1x64x256xf32> to vector<64x256xf32>
    %cst_22 = arith.constant dense<0.000000e+00> : vector<32x256xf32>
    %20 = tpu.matmul %17, %19, %cst_22 {dimension_numbers = #tpu.dot_dimension_numbers<[1], [0], [0], [1], [0, 0, 1, 1], [], []>} : vector<32x64xf32>, vector<64x256xf32>, vector<32x256xf32> -> vector<32x256xf32>
    %21 = arith.addf %14, %20 : vector<32x256xf32>
    %c0_23 = arith.constant 0 : index
    %c0_24 = arith.constant 0 : index
    %22 = vector.load %arg4[%c0_23, %c0_24] : memref<1x256xf32, #tpu.memory_space<vmem>>, vector<1x256xf32>
    %23 = vector.broadcast %22 : vector<1x256xf32> to vector<32x256xf32>
    %24 = arith.addf %21, %23 : vector<32x256xf32>
    %c0_25 = arith.constant 0 : index
    %c0_26 = arith.constant 0 : index
    %c0_27 = arith.constant 0 : index
    %25 = vector.load %arg6[%c0_25, %c0_26, %c0_27] : memref<1x32x256xf32, #tpu.memory_space<vmem>>, vector<1x32x256xf32>
    %26 = vector.shape_cast %25 : vector<1x32x256xf32> to vector<32x256xf32>
    %27 = vector.shape_cast %24 : vector<32x256xf32> to vector<1x32x256xf32>
    tpu.vector_store %arg6[%c0_25, %c0_26, %c0_27], %27 {strides = array<i32>} : memref<1x32x256xf32, #tpu.memory_space<vmem>>, vector<1x32x256xf32>,
    %cst_28 = arith.constant dense<0.000000e+00> : vector<256xf32>
    %28 = vector.multi_reduction <add>, %24, %cst_28 [0] : vector<32x256xf32> to vector<256xf32>
    %29 = vector.shape_cast %28 : vector<256xf32> to vector<1x256xf32>
    %30 = arith.mulf %24, %24 : vector<32x256xf32>
    %cst_29 = arith.constant dense<0.000000e+00> : vector<256xf32>
    %31 = vector.multi_reduction <add>, %30, %cst_29 [0] : vector<32x256xf32> to vector<256xf32>
    %32 = vector.shape_cast %31 : vector<256xf32> to vector<1x256xf32>
    %33 = tpu.concatenate %29, %32 in 0 : vector<1x256xf32>, vector<1x256xf32> -> vector<2x256xf32>
    %c0_30 = arith.constant 0 : index
    %c0_31 = arith.constant 0 : index
    %34 = vector.load %arg5[%c0_30, %c0_31] : memref<256x8xf32, #tpu.memory_space<vmem>>, vector<256x8xf32>
    %cst_32 = arith.constant dense<0.000000e+00> : vector<2x8xf32>
    %35 = tpu.matmul %33, %34, %cst_32 {dimension_numbers = #tpu.dot_dimension_numbers<[1], [0], [0], [1], [0, 0, 1, 1], [], []>} : vector<2x256xf32>, vector<256x8xf32>, vector<2x8xf32> -> vector<2x8xf32>
    %c0_33 = arith.constant 0 : index
    %c0_34 = arith.constant 0 : index
    %c0_35 = arith.constant 0 : index
    %36 = vector.load %arg7[%c0_33, %c0_34, %c0_35] : memref<1x2x8xf32, #tpu.memory_space<vmem>>, vector<1x2x8xf32>
    %37 = vector.shape_cast %36 : vector<1x2x8xf32> to vector<2x8xf32>
    %38 = vector.shape_cast %35 : vector<2x8xf32> to vector<1x2x8xf32>
    tpu.vector_store %arg7[%c0_33, %c0_34, %c0_35], %38 {strides = array<i32>} : memref<1x2x8xf32, #tpu.memory_space<vmem>>, vector<1x2x8xf32>,
    return
  }
  func.func @transform_0(%arg0: i32) -> (i32, i32, i32) {
    %c0_i32 = arith.constant 0 : i32
    %c0_i32_0 = arith.constant 0 : i32
    %c0_i32_1 = arith.constant 0 : i32
    %c0_i32_2 = arith.constant 0 : i32
    return %c0_i32, %c0_i32_0, %c0_i32_1 : i32, i32, i32
  }
  func.func @transform_1(%arg0: i32) -> (i32, i32, i32) {
    %c0_i32 = arith.constant 0 : i32
    %c0_i32_0 = arith.constant 0 : i32
    %c0_i32_1 = arith.constant 0 : i32
    return %arg0, %c0_i32, %c0_i32_0 : i32, i32, i32
  }
  func.func @transform_2(%arg0: i32) -> (i32, i32, i32) {
    %c0_i32 = arith.constant 0 : i32
    %c0_i32_0 = arith.constant 0 : i32
    %c0_i32_1 = arith.constant 0 : i32
    %c0_i32_2 = arith.constant 0 : i32
    return %c0_i32, %c0_i32_0, %c0_i32_1 : i32, i32, i32
  }
  func.func @transform_3(%arg0: i32) -> (i32, i32) {
    %c0_i32 = arith.constant 0 : i32
    %c0_i32_0 = arith.constant 0 : i32
    %c0_i32_1 = arith.constant 0 : i32
    return %c0_i32, %c0_i32_0 : i32, i32
  }
  func.func @transform_4(%arg0: i32) -> (i32, i32) {
    %c0_i32 = arith.constant 0 : i32
    %c0_i32_0 = arith.constant 0 : i32
    %c0_i32_1 = arith.constant 0 : i32
    return %c0_i32, %c0_i32_0 : i32, i32
  }
  func.func @transform_5(%arg0: i32) -> (i32, i32, i32) {
    %c0_i32 = arith.constant 0 : i32
    %c0_i32_0 = arith.constant 0 : i32
    %c0_i32_1 = arith.constant 0 : i32
    return %arg0, %c0_i32, %c0_i32_0 : i32, i32, i32
  }
  func.func @transform_6(%arg0: i32) -> (i32, i32, i32) {
    %c0_i32 = arith.constant 0 : i32
    %c0_i32_0 = arith.constant 0 : i32
    %c0_i32_1 = arith.constant 0 : i32
    return %arg0, %c0_i32, %c0_i32_0 : i32, i32, i32
  }
}

module attributes {stable_mosaic.version = 11 : i64} {
  func.func @_bn_relu_kernel(%arg0: i32, %arg1: memref<1x32x256xf32, #tpu.memory_space<vmem>>, %arg2: memref<1x256xf32, #tpu.memory_space<vmem>>, %arg3: memref<1x256xf32, #tpu.memory_space<vmem>>, %arg4: memref<1x32x256xf32, #tpu.memory_space<vmem>>) attributes {dimension_semantics = [#tpu.dimension_semantics<parallel>], iteration_bounds = array<i64: 2>, scalar_prefetch = 0 : i64, scratch_operands = 0 : i64, tpu.core_type = #tpu.core_type<tc>, window_params = [{transform_indices = @transform_0, window_bounds = array<i64: 1, 32, 256>}, {pipeline_mode = #tpu.pipeline_mode<synchronous>, transform_indices = @transform_1, window_bounds = array<i64: 1, 256>}, {pipeline_mode = #tpu.pipeline_mode<synchronous>, transform_indices = @transform_2, window_bounds = array<i64: 1, 256>}, {transform_indices = @transform_3, window_bounds = array<i64: 1, 32, 256>}]} {
    %c0 = arith.constant 0 : index
    %c0_0 = arith.constant 0 : index
    %c0_1 = arith.constant 0 : index
    %0 = vector.load %arg1[%c0, %c0_0, %c0_1] : memref<1x32x256xf32, #tpu.memory_space<vmem>>, vector<1x32x256xf32>
    %1 = vector.shape_cast %0 : vector<1x32x256xf32> to vector<32x256xf32>
    %c0_2 = arith.constant 0 : index
    %c0_3 = arith.constant 0 : index
    %2 = vector.load %arg2[%c0_2, %c0_3] : memref<1x256xf32, #tpu.memory_space<vmem>>, vector<1x256xf32>
    %3 = vector.broadcast %2 : vector<1x256xf32> to vector<32x256xf32>
    %4 = arith.mulf %1, %3 : vector<32x256xf32>
    %c0_4 = arith.constant 0 : index
    %c0_5 = arith.constant 0 : index
    %5 = vector.load %arg3[%c0_4, %c0_5] : memref<1x256xf32, #tpu.memory_space<vmem>>, vector<1x256xf32>
    %6 = vector.broadcast %5 : vector<1x256xf32> to vector<32x256xf32>
    %7 = arith.addf %4, %6 : vector<32x256xf32>
    %cst = arith.constant 0.000000e+00 : f32
    %8 = vector.broadcast %cst : f32 to vector<32x256xf32>
    %9 = arith.maximumf %7, %8 : vector<32x256xf32>
    %c0_6 = arith.constant 0 : index
    %c0_7 = arith.constant 0 : index
    %c0_8 = arith.constant 0 : index
    %10 = vector.load %arg4[%c0_6, %c0_7, %c0_8] : memref<1x32x256xf32, #tpu.memory_space<vmem>>, vector<1x32x256xf32>
    %11 = vector.shape_cast %10 : vector<1x32x256xf32> to vector<32x256xf32>
    %12 = vector.shape_cast %9 : vector<32x256xf32> to vector<1x32x256xf32>
    tpu.vector_store %arg4[%c0_6, %c0_7, %c0_8], %12 {strides = array<i32>} : memref<1x32x256xf32, #tpu.memory_space<vmem>>, vector<1x32x256xf32>,
    return
  }
  func.func @transform_0(%arg0: i32) -> (i32, i32, i32) {
    %c0_i32 = arith.constant 0 : i32
    %c0_i32_0 = arith.constant 0 : i32
    %c0_i32_1 = arith.constant 0 : i32
    return %arg0, %c0_i32, %c0_i32_0 : i32, i32, i32
  }
  func.func @transform_1(%arg0: i32) -> (i32, i32) {
    %c0_i32 = arith.constant 0 : i32
    %c0_i32_0 = arith.constant 0 : i32
    %c0_i32_1 = arith.constant 0 : i32
    return %c0_i32, %c0_i32_0 : i32, i32
  }
  func.func @transform_2(%arg0: i32) -> (i32, i32) {
    %c0_i32 = arith.constant 0 : i32
    %c0_i32_0 = arith.constant 0 : i32
    %c0_i32_1 = arith.constant 0 : i32
    return %c0_i32, %c0_i32_0 : i32, i32
  }
  func.func @transform_3(%arg0: i32) -> (i32, i32, i32) {
    %c0_i32 = arith.constant 0 : i32
    %c0_i32_0 = arith.constant 0 : i32
    %c0_i32_1 = arith.constant 0 : i32
    return %arg0, %c0_i32, %c0_i32_0 : i32, i32, i32
  }
}

</mosaic_0001>

<llo_original>
// kernel: upconv_block.3
$region0: #{upconv_block.3}
  #allocation0 [shape = 'u32[]', space=smem, size = 0x4, offset = 0x4, fixed_abs, tag = 'smem constant byte address 0x4 - core index']
  #allocation1 [shape = 'u32[144,128]{1,0:T(1,128)}', space=vmem, size = 0x12000, scoped, tag = 'internal scratch']
  %s0 = inlined_call_operand.vmem [shape: f32[2,32,256], index: 0, kind: input, shape index: {}]
  %s1 = inlined_call_operand.vmem [shape: f32[1,256], index: 1, kind: input, shape index: {}]
  %s2 = inlined_call_operand.vmem [shape: f32[1,256], index: 2, kind: input, shape index: {}]
  %s3 = inlined_call_operand.vmem [shape: f32[2,32,256], index: 3, kind: output, shape index: {}]
  %s4 = sld [smem:[#allocation0]]
  $region45: #{upconv_block.3} parent=0
    _
  %s6 = ssub.s32 1, %s4
  %s7 = scalar_select 0, %s6, %s4
  loop: start=0, step=1, limit=4
  $region2: #{upconv_block.3} parent=0 // loop_pre_header
    _
  $region3: #{upconv_block.3} parent=0 // loop_header
    %s9 = sphi 0, %s13
    %p10 = scmp.ge.s32.totalorder %s9, 4
    %s19 = sphi 0, %s21
    %s22 = sphi 0, %s19
    %s23 = sphi 0, %s22
    %s39 = sphi 0, %s23
    %s43 = sphi 0, %s43
    %s45 = sphi 0, %s43
    %s46 = sphi 0, %s45
    %s60 = sphi 0, %s46
    %s64 = sphi 0, %s64
    %s66 = sphi 0, %s64
    %s67 = sphi 0, %s66
    %s81 = sphi 0, %s67
    %s87 = sphi 0, %s89
    %s90 = sphi 0, %s87
    %s91 = sphi 0, %s90
    %s107 = sphi 0, %s91
  $region4: #{upconv_block.3} parent=0 // loop_header_branch
    %12 = sbr.rel (%p10) target = $region8
  $region5: #{upconv_block.3} parent=0 // loop_body
    %s14 = ssub.s32 %s9, 1
    %s15 = ssub.s32 %s9, 2
    %s16 = sadd.s32 %s9, 1
    %s17 = ssub.s32 %s9, %s16
    %p18 = scmp.eq.s32.totalorder %s17, 0
    %s20 = sadd.s32 %s19, 1
    %s21 = scalar_select %p18, %s19, %s20
    %p24 = pneg %p18
    %p25 = scmp.eq.s32.totalorder %s9, 1
    %p26 = por %p24, %p25
    %p27 = scmp.ne.s32.totalorder %s19, %s22
    %p28 = scmp.eq.s32.totalorder %s9, 0
    %p29 = por %p27, %p28
    %p30 = scmp.ne.s32.totalorder %s19, %s22
    %p31 = scmp.eq.s32.totalorder %s14, 1
    %p32 = por %p30, %p31
    %p33 = scmp.ne.s32.totalorder %s22, %s23
    %p34 = scmp.eq.s32.totalorder %s14, 0
    %p35 = por %p33, %p34
    %p36 = scmp.ne.s32.totalorder %s22, %s23
    %p37 = scmp.eq.s32.totalorder %s15, 1
    %p38 = por %p36, %p37
    %p40 = scmp.ne.s32.totalorder %s23, %s39
    %p41 = scmp.eq.s32.totalorder %s15, 0
    %p42 = por %p40, %p41
    %s44 = sadd.s32 %s43, 1
    %p47 = scmp.eq.s32.totalorder %s9, 1
    %p48 = scmp.ne.s32.totalorder %s43, %s45
    %p49 = scmp.eq.s32.totalorder %s9, 0
    %p50 = por %p48, %p49
    %p51 = scmp.ne.s32.totalorder %s43, %s45
    %p52 = scmp.eq.s32.totalorder %s14, 1
    %p53 = por %p51, %p52
    %p54 = scmp.ne.s32.totalorder %s45, %s46
    %p55 = scmp.eq.s32.totalorder %s14, 0
    %p56 = por %p54, %p55
    %p57 = scmp.ne.s32.totalorder %s45, %s46
    %p58 = scmp.eq.s32.totalorder %s15, 1
    %p59 = por %p57, %p58
    %p61 = scmp.ne.s32.totalorder %s46, %s60
    %p62 = scmp.eq.s32.totalorder %s15, 0
    %p63 = por %p61, %p62
    %s65 = sadd.s32 %s64, 1
    %p68 = scmp.eq.s32.totalorder %s9, 1
    %p69 = scmp.ne.s32.totalorder %s64, %s66
    %p70 = scmp.eq.s32.totalorder %s9, 0
    %p71 = por %p69, %p70
    %p72 = scmp.ne.s32.totalorder %s64, %s66
    %p73 = scmp.eq.s32.totalorder %s14, 1
    %p74 = por %p72, %p73
    %p75 = scmp.ne.s32.totalorder %s66, %s67
    %p76 = scmp.eq.s32.totalorder %s14, 0
    %p77 = por %p75, %p76
    %p78 = scmp.ne.s32.totalorder %s66, %s67
    %p79 = scmp.eq.s32.totalorder %s15, 1
    %p80 = por %p78, %p79
    %p82 = scmp.ne.s32.totalorder %s67, %s81
    %p83 = scmp.eq.s32.totalorder %s15, 0
    %p84 = por %p82, %p83
    %s85 = ssub.s32 %s9, %s16
    %p86 = scmp.eq.s32.totalorder %s85, 0
    %s88 = sadd.s32 %s87, 1
    %s89 = scalar_select %p86, %s87, %s88
    %p92 = pneg %p86
    %p93 = scmp.eq.s32.totalorder %s9, 1
    %p94 = por %p92, %p93
    %p95 = scmp.ne.s32.totalorder %s87, %s90
    %p96 = scmp.eq.s32.totalorder %s9, 0
    %p97 = por %p95, %p96
    %p98 = scmp.ne.s32.totalorder %s87, %s90
    %p99 = scmp.eq.s32.totalorder %s14, 1
    %p100 = por %p98, %p99
    %p101 = scmp.ne.s32.totalorder %s90, %s91
    %p102 = scmp.eq.s32.totalorder %s14, 0
    %p103 = por %p101, %p102
    %p104 = scmp.ne.s32.totalorder %s90, %s91
    %p105 = scmp.eq.s32.totalorder %s15, 1
    %p106 = por %p104, %p105
    %p108 = scmp.ne.s32.totalorder %s91, %s107
    %p109 = scmp.eq.s32.totalorder %s15, 0
    %p110 = por %p108, %p109
    %p111 = scmp.le.s32.totalorder 1, %s9
    %p112 = scmp.lt.s32.totalorder %s9, 3
    %p113 = pnand %p111, %p112
    %p114 = pneg %p113
    // Predicated region
    $region9: #{upconv_block.3} parent=5 // pred_check
      _
    $region10: #{upconv_block.3} parent=5 // pred_check_branch
      %116 = sbr.rel (%p113) target = $region12
    $region11: #{upconv_block.3} parent=5 // pred_region
      %s117 = ssub.s32 %s9, 1
      // Predicated region
      $region13: #{upconv_block.3} parent=11 // pred_check
        %p118 = pneg %p56
      $region14: #{upconv_block.3} parent=11 // pred_check_branch
        %120 = sbr.rel (%p118) target = $region16
      $region15: #{upconv_block.3} parent=11 // pred_region
        _
      $region16: #{upconv_block.3} parent=11 // pred_fallthru
        _
      // Predicated region
      $region17: #{upconv_block.3} parent=11 // pred_check
        %p121 = pneg %p77
      $region18: #{upconv_block.3} parent=11 // pred_check_branch
        %123 = sbr.rel (%p121) target = $region20
      $region19: #{upconv_block.3} parent=11 // pred_region
        _
      $region20: #{upconv_block.3} parent=11 // pred_fallthru
        _
    $region12: #{upconv_block.3} parent=5 // pred_fallthru
      _
    %p124 = scmp.lt.s32.totalorder %s9, 2
    // Predicated region
    $region21: #{upconv_block.3} parent=5 // pred_check
      %p125 = pneg %p124
    $region22: #{upconv_block.3} parent=5 // pred_check_branch
      %127 = sbr.rel (%p125) target = $region24
    $region23: #{upconv_block.3} parent=5 // pred_region
      // Predicated region
      $region25: #{upconv_block.3} parent=23 // pred_check
        %p128 = pneg %p29
      $region26: #{upconv_block.3} parent=23 // pred_check_branch
        %130 = sbr.rel (%p128) target = $region28
      $region27: #{upconv_block.3} parent=23 // pred_region
        %p131 = scmp.lt.s32.totalorder %s9, 1
        %s132 = scalar_select %p131, %s9, 1
        %s133 = smul.addr %s132, 8
        %s134 = smul.addr %s133, 8
        %s135 = scalar_lea.vmem %s0, %s134
      $region28: #{upconv_block.3} parent=23 // pred_fallthru
        _
    $region24: #{upconv_block.3} parent=5 // pred_fallthru
      _
    %p136 = scmp.le.s32.totalorder 1, %s9
    %p137 = scmp.lt.s32.totalorder %s9, 3
    %p138 = pnand %p136, %p137
    %p139 = pneg %p138
    // Predicated region
    $region29: #{upconv_block.3} parent=5 // pred_check
      _
    $region30: #{upconv_block.3} parent=5 // pred_check_branch
      %141 = sbr.rel (%p138) target = $region32
    $region31: #{upconv_block.3} parent=5 // pred_region
      %s142 = ssub.s32 %s9, 1
      %p143 = scmp.lt.s32.totalorder %s14, 1
      %s144 = scalar_select %p143, %s14, 1
      %s145 = smul.addr %s144, 8
      %s146 = smul.addr %s145, 8
      %s147 = scalar_lea.vmem %s0, %s146
      %p148 = pneg %p35
      %p149 = pneg %p32
      %p150 = pneg %p56
      %p151 = pneg %p53
      %p152 = pneg %p77
      %p153 = pneg %p74
      %p154 = pneg %p103
      %p155 = pneg %p100
      %p156 = scmp.lt.s32.totalorder %s14, 1
      %s157 = scalar_select %p156, %s14, 1
      %s158 = smul.addr %s157, 8
      %s159 = smul.addr %s158, 8
      %s160 = scalar_lea.vmem %s3, %s159
      %p161 = scmp.lt.s32.totalorder %s14, 1
      %s162 = scalar_select %p161, %s14, 1
      %s163 = smul.addr %s162, 8
      %s164 = smul.addr %s163, 8
      %s165 = scalar_lea.vmem %s0, %s164
      %p166 = scmp.lt.s32.totalorder %s14, 1
      %s167 = scalar_select %p166, %s14, 1
      %s168 = smul.addr %s167, 8
      %s169 = smul.addr %s168, 8
      %s170 = scalar_lea.vmem %s3, %s169
      %v171 = vld [vmem:[%s165] sm:$0xff]
      %v172 = vld [vmem:[%s165 + $0x8] sm:$0xff]
      %v173 = vld [vmem:[%s165 + $0x10] sm:$0xff]
      %v174 = vld [vmem:[%s165 + $0x18] sm:$0xff]
      %v175 = vld [vmem:[%s165 + $0x20] sm:$0xff]
      %v176 = vld [vmem:[%s165 + $0x28] sm:$0xff]
      %v177 = vld [vmem:[%s165 + $0x30] sm:$0xff]
      %v178 = vld [vmem:[%s165 + $0x38] sm:$0xff]
      %v179 = vld [vmem:[%s1] sm:$0x3]
      %v181 = vlaneseq
      %v182 = vshrl.u32 %v181, 7
      %v183 = vsub.s32 0, %v182
      %v184 = vrot.slane %v179, %v183
      %v185 = vlaneseq
      %v186 = vshrl.u32 %v185, 7
      %v187 = vsub.s32 1, %v186
      %v188 = vrot.slane %v179, %v187
      %v191 = vmul.f32 %v171, %v184
      %v192 = vmul.f32 %v172, %v188
      %v193 = vmul.f32 %v173, %v184
      %v194 = vmul.f32 %v174, %v188
      %v195 = vmul.f32 %v175, %v184
      %v196 = vmul.f32 %v176, %v188
      %v197 = vmul.f32 %v177, %v184
      %v198 = vmul.f32 %v178, %v188
      %v199 = vld [vmem:[%s2] sm:$0x3]
      %v201 = vlaneseq
      %v202 = vshrl.u32 %v201, 7
      %v203 = vsub.s32 0, %v202
      %v204 = vrot.slane %v199, %v203
      %v205 = vlaneseq
      %v206 = vshrl.u32 %v205, 7
      %v207 = vsub.s32 1, %v206
      %v208 = vrot.slane %v199, %v207
      %v211 = vadd.f32 %v191, %v204
      %v212 = vadd.f32 %v192, %v208
      %v213 = vadd.f32 %v193, %v204
      %v214 = vadd.f32 %v194, %v208
      %v215 = vadd.f32 %v195, %v204
      %v216 = vadd.f32 %v196, %v208
      %v217 = vadd.f32 %v197, %v204
      %v218 = vadd.f32 %v198, %v208
      %v219 = vmax.f32 %v211, 0.0
      %v220 = vmax.f32 %v212, 0.0
      %v221 = vmax.f32 %v213, 0.0
      %v222 = vmax.f32 %v214, 0.0
      %v223 = vmax.f32 %v215, 0.0
      %v224 = vmax.f32 %v216, 0.0
      %v225 = vmax.f32 %v217, 0.0
      %v226 = vmax.f32 %v218, 0.0
      %227 = vst [vmem:[%s170] sm:$0xff] %v219
      %228 = vst [vmem:[%s170 + $0x8] sm:$0xff] %v220
      %229 = vst [vmem:[%s170 + $0x10] sm:$0xff] %v221
      %230 = vst [vmem:[%s170 + $0x18] sm:$0xff] %v222
      %231 = vst [vmem:[%s170 + $0x20] sm:$0xff] %v223
      %232 = vst [vmem:[%s170 + $0x28] sm:$0xff] %v224
      %233 = vst [vmem:[%s170 + $0x30] sm:$0xff] %v225
      %234 = vst [vmem:[%s170 + $0x38] sm:$0xff] %v226
      %p235 = scmp.lt.s32.totalorder %s14, 1
      %s236 = scalar_select %p235, %s14, 1
      %s237 = smul.addr %s236, 8
      %s238 = smul.addr %s237, 8
      %s239 = scalar_lea.vmem %s3, %s238
      // Predicated region
      $region33: #{upconv_block.3} parent=31 // pred_check
        %p240 = pneg %p100
      $region34: #{upconv_block.3} parent=31 // pred_check_branch
        %242 = sbr.rel (%p240) target = $region36
      $region35: #{upconv_block.3} parent=31 // pred_region
        _
      $region36: #{upconv_block.3} parent=31 // pred_fallthru
        _
    $region32: #{upconv_block.3} parent=5 // pred_fallthru
      _
    %p243 = scmp.le.s32.totalorder 2, %s9
    // Predicated region
    $region37: #{upconv_block.3} parent=5 // pred_check
      %p244 = pneg %p243
    $region38: #{upconv_block.3} parent=5 // pred_check_branch
      %246 = sbr.rel (%p244) target = $region40
    $region39: #{upconv_block.3} parent=5 // pred_region
      %s247 = ssub.s32 %s9, 2
      // Predicated region
      $region41: #{upconv_block.3} parent=39 // pred_check
        %p248 = pneg %p106
      $region42: #{upconv_block.3} parent=39 // pred_check_branch
        %250 = sbr.rel (%p248) target = $region44
      $region43: #{upconv_block.3} parent=39 // pred_region
        %p251 = scmp.lt.s32.totalorder %s15, 1
        %s252 = scalar_select %p251, %s15, 1
        %s253 = smul.addr %s252, 8
        %s254 = smul.addr %s253, 8
        %s255 = scalar_lea.vmem %s3, %s254
      $region44: #{upconv_block.3} parent=39 // pred_fallthru
        _
    $region40: #{upconv_block.3} parent=5 // pred_fallthru
      _
  $region6: #{upconv_block.3} parent=0 // loop_footer
    %s13 = sadd.s32 1, %s9
  $region7: #{upconv_block.3} parent=0 // loop_footer_branch
    %8 = sbr.rel target = $region3
  $region8: #{upconv_block.3} parent=0 // loop_exit
    _

// kernel: upconv_block.2
$region0: #{upconv_block.2}
  #allocation0 [shape = 'u32[]', space=smem, size = 0x4, offset = 0x4, fixed_abs, tag = 'smem constant byte address 0x4 - core index']
  #allocation1 [shape = 'u32[144,128]{1,0:T(1,128)}', space=vmem, size = 0x12000, scoped, tag = 'internal scratch']
  %s0 = inlined_call_operand.vmem [shape: f32[3,32,16], index: 0, kind: input, shape index: {}]
  %s1 = inlined_call_operand.vmem [shape: f32[2,16,64], index: 1, kind: input, shape index: {}]
  %s2 = inlined_call_operand.vmem [shape: f32[3,64,256], index: 2, kind: input, shape index: {}]
  %s3 = inlined_call_operand.vmem [shape: f32[1,256], index: 3, kind: input, shape index: {}]
  %s4 = inlined_call_operand.vmem [shape: f32[256,8], index: 4, kind: input, shape index: {}]
  %s5 = inlined_call_operand.vmem [shape: f32[2,32,256], index: 5, kind: output, shape index: {0}]
  %s6 = inlined_call_operand.vmem [shape: f32[2,2,8], index: 6, kind: output, shape index: {1}]
  %7 = xla_tuple %s5, %s6
  %s8 = sld [smem:[#allocation0]]
  $region61: #{upconv_block.2} parent=0
    _
  %s10 = ssub.s32 1, %s8
  %s11 = scalar_select 0, %s10, %s8
  loop: start=0, step=1, limit=4
  $region2: #{upconv_block.2} parent=0 // loop_pre_header
    _
  $region3: #{upconv_block.2} parent=0 // loop_header
    %s13 = sphi 0, %s17
    %p14 = scmp.ge.s32.totalorder %s13, 4
    %s21 = sphi 0, %s21
    %s23 = sphi 0, %s21
    %s24 = sphi 0, %s23
    %s38 = sphi 0, %s24
    %s44 = sphi 0, %s46
    %s47 = sphi 0, %s44
    %s48 = sphi 0, %s47
    %s64 = sphi 0, %s48
    %s68 = sphi 0, %s68
    %s70 = sphi 0, %s68
    %s71 = sphi 0, %s70
    %s85 = sphi 0, %s71
    %s89 = sphi 0, %s89
    %s91 = sphi 0, %s89
    %s92 = sphi 0, %s91
    %s106 = sphi 0, %s92
    %s110 = sphi 0, %s110
    %s112 = sphi 0, %s110
    %s113 = sphi 0, %s112
    %s127 = sphi 0, %s113
    %s133 = sphi 0, %s135
    %s136 = sphi 0, %s133
    %s137 = sphi 0, %s136
    %s153 = sphi 0, %s137
    %s159 = sphi 0, %s161
    %s162 = sphi 0, %s159
    %s163 = sphi 0, %s162
    %s179 = sphi 0, %s163
  $region4: #{upconv_block.2} parent=0 // loop_header_branch
    %16 = sbr.rel (%p14) target = $region8
  $region5: #{upconv_block.2} parent=0 // loop_body
    %s18 = ssub.s32 %s13, 1
    %s19 = ssub.s32 %s13, 2
    %s20 = sadd.s32 %s13, 1
    %s22 = sadd.s32 %s21, 1
    %p25 = scmp.eq.s32.totalorder %s13, 1
    %p26 = scmp.ne.s32.totalorder %s21, %s23
    %p27 = scmp.eq.s32.totalorder %s13, 0
    %p28 = por %p26, %p27
    %p29 = scmp.ne.s32.totalorder %s21, %s23
    %p30 = scmp.eq.s32.totalorder %s18, 1
    %p31 = por %p29, %p30
    %p32 = scmp.ne.s32.totalorder %s23, %s24
    %p33 = scmp.eq.s32.totalorder %s18, 0
    %p34 = por %p32, %p33
    %p35 = scmp.ne.s32.totalorder %s23, %s24
    %p36 = scmp.eq.s32.totalorder %s19, 1
    %p37 = por %p35, %p36
    %p39 = scmp.ne.s32.totalorder %s24, %s38
    %p40 = scmp.eq.s32.totalorder %s19, 0
    %p41 = por %p39, %p40
    %s42 = ssub.s32 %s13, %s20
    %p43 = scmp.eq.s32.totalorder %s42, 0
    %s45 = sadd.s32 %s44, 1
    %s46 = scalar_select %p43, %s44, %s45
    %p49 = pneg %p43
    %p50 = scmp.eq.s32.totalorder %s13, 1
    %p51 = por %p49, %p50
    %p52 = scmp.ne.s32.totalorder %s44, %s47
    %p53 = scmp.eq.s32.totalorder %s13, 0
    %p54 = por %p52, %p53
    %p55 = scmp.ne.s32.totalorder %s44, %s47
    %p56 = scmp.eq.s32.totalorder %s18, 1
    %p57 = por %p55, %p56
    %p58 = scmp.ne.s32.totalorder %s47, %s48
    %p59 = scmp.eq.s32.totalorder %s18, 0
    %p60 = por %p58, %p59
    %p61 = scmp.ne.s32.totalorder %s47, %s48
    %p62 = scmp.eq.s32.totalorder %s19, 1
    %p63 = por %p61, %p62
    %p65 = scmp.ne.s32.totalorder %s48, %s64
    %p66 = scmp.eq.s32.totalorder %s19, 0
    %p67 = por %p65, %p66
    %s69 = sadd.s32 %s68, 1
    %p72 = scmp.eq.s32.totalorder %s13, 1
    %p73 = scmp.ne.s32.totalorder %s68, %s70
    %p74 = scmp.eq.s32.totalorder %s13, 0
    %p75 = por %p73, %p74
    %p76 = scmp.ne.s32.totalorder %s68, %s70
    %p77 = scmp.eq.s32.totalorder %s18, 1
    %p78 = por %p76, %p77
    %p79 = scmp.ne.s32.totalorder %s70, %s71
    %p80 = scmp.eq.s32.totalorder %s18, 0
    %p81 = por %p79, %p80
    %p82 = scmp.ne.s32.totalorder %s70, %s71
    %p83 = scmp.eq.s32.totalorder %s19, 1
    %p84 = por %p82, %p83
    %p86 = scmp.ne.s32.totalorder %s71, %s85
    %p87 = scmp.eq.s32.totalorder %s19, 0
    %p88 = por %p86, %p87
    %s90 = sadd.s32 %s89, 1
    %p93 = scmp.eq.s32.totalorder %s13, 1
    %p94 = scmp.ne.s32.totalorder %s89, %s91
    %p95 = scmp.eq.s32.totalorder %s13, 0
    %p96 = por %p94, %p95
    %p97 = scmp.ne.s32.totalorder %s89, %s91
    %p98 = scmp.eq.s32.totalorder %s18, 1
    %p99 = por %p97, %p98
    %p100 = scmp.ne.s32.totalorder %s91, %s92
    %p101 = scmp.eq.s32.totalorder %s18, 0
    %p102 = por %p100, %p101
    %p103 = scmp.ne.s32.totalorder %s91, %s92
    %p104 = scmp.eq.s32.totalorder %s19, 1
    %p105 = por %p103, %p104
    %p107 = scmp.ne.s32.totalorder %s92, %s106
    %p108 = scmp.eq.s32.totalorder %s19, 0
    %p109 = por %p107, %p108
    %s111 = sadd.s32 %s110, 1
    %p114 = scmp.eq.s32.totalorder %s13, 1
    %p115 = scmp.ne.s32.totalorder %s110, %s112
    %p116 = scmp.eq.s32.totalorder %s13, 0
    %p117 = por %p115, %p116
    %p118 = scmp.ne.s32.totalorder %s110, %s112
    %p119 = scmp.eq.s32.totalorder %s18, 1
    %p120 = por %p118, %p119
    %p121 = scmp.ne.s32.totalorder %s112, %s113
    %p122 = scmp.eq.s32.totalorder %s18, 0
    %p123 = por %p121, %p122
    %p124 = scmp.ne.s32.totalorder %s112, %s113
    %p125 = scmp.eq.s32.totalorder %s19, 1
    %p126 = por %p124, %p125
    %p128 = scmp.ne.s32.totalorder %s113, %s127
    %p129 = scmp.eq.s32.totalorder %s19, 0
    %p130 = por %p128, %p129
    %s131 = ssub.s32 %s13, %s20
    %p132 = scmp.eq.s32.totalorder %s131, 0
    %s134 = sadd.s32 %s133, 1
    %s135 = scalar_select %p132, %s133, %s134
    %p138 = pneg %p132
    %p139 = scmp.eq.s32.totalorder %s13, 1
    %p140 = por %p138, %p139
    %p141 = scmp.ne.s32.totalorder %s133, %s136
    %p142 = scmp.eq.s32.totalorder %s13, 0
    %p143 = por %p141, %p142
    %p144 = scmp.ne.s32.totalorder %s133, %s136
    %p145 = scmp.eq.s32.totalorder %s18, 1
    %p146 = por %p144, %p145
    %p147 = scmp.ne.s32.totalorder %s136, %s137
    %p148 = scmp.eq.s32.totalorder %s18, 0
    %p149 = por %p147, %p148
    %p150 = scmp.ne.s32.totalorder %s136, %s137
    %p151 = scmp.eq.s32.totalorder %s19, 1
    %p152 = por %p150, %p151
    %p154 = scmp.ne.s32.totalorder %s137, %s153
    %p155 = scmp.eq.s32.totalorder %s19, 0
    %p156 = por %p154, %p155
    %s157 = ssub.s32 %s13, %s20
    %p158 = scmp.eq.s32.totalorder %s157, 0
    %s160 = sadd.s32 %s159, 1
    %s161 = scalar_select %p158, %s159, %s160
    %p164 = pneg %p158
    %p165 = scmp.eq.s32.totalorder %s13, 1
    %p166 = por %p164, %p165
    %p167 = scmp.ne.s32.totalorder %s159, %s162
    %p168 = scmp.eq.s32.totalorder %s13, 0
    %p169 = por %p167, %p168
    %p170 = scmp.ne.s32.totalorder %s159, %s162
    %p171 = scmp.eq.s32.totalorder %s18, 1
    %p172 = por %p170, %p171
    %p173 = scmp.ne.s32.totalorder %s162, %s163
    %p174 = scmp.eq.s32.totalorder %s18, 0
    %p175 = por %p173, %p174
    %p176 = scmp.ne.s32.totalorder %s162, %s163
    %p177 = scmp.eq.s32.totalorder %s19, 1
    %p178 = por %p176, %p177
    %p180 = scmp.ne.s32.totalorder %s163, %s179
    %p181 = scmp.eq.s32.totalorder %s19, 0
    %p182 = por %p180, %p181
    %p183 = scmp.le.s32.totalorder 1, %s13
    %p184 = scmp.lt.s32.totalorder %s13, 3
    %p185 = pnand %p183, %p184
    %p186 = pneg %p185
    // Predicated region
    $region9: #{upconv_block.2} parent=5 // pred_check
      _
    $region10: #{upconv_block.2} parent=5 // pred_check_branch
      %188 = sbr.rel (%p185) target = $region12
    $region11: #{upconv_block.2} parent=5 // pred_region
      %s189 = ssub.s32 %s13, 1
      // Predicated region
      $region13: #{upconv_block.2} parent=11 // pred_check
        %p190 = pneg %p34
      $region14: #{upconv_block.2} parent=11 // pred_check_branch
        %192 = sbr.rel (%p190) target = $region16
      $region15: #{upconv_block.2} parent=11 // pred_region
        _
      $region16: #{upconv_block.2} parent=11 // pred_fallthru
        _
      // Predicated region
      $region17: #{upconv_block.2} parent=11 // pred_check
        %p193 = pneg %p81
      $region18: #{upconv_block.2} parent=11 // pred_check_branch
        %195 = sbr.rel (%p193) target = $region20
      $region19: #{upconv_block.2} parent=11 // pred_region
        _
      $region20: #{upconv_block.2} parent=11 // pred_fallthru
        _
      // Predicated region
      $region21: #{upconv_block.2} parent=11 // pred_check
        %p196 = pneg %p102
      $region22: #{upconv_block.2} parent=11 // pred_check_branch
        %198 = sbr.rel (%p196) target = $region24
      $region23: #{upconv_block.2} parent=11 // pred_region
        _
      $region24: #{upconv_block.2} parent=11 // pred_fallthru
        _
      // Predicated region
      $region25: #{upconv_block.2} parent=11 // pred_check
        %p199 = pneg %p123
      $region26: #{upconv_block.2} parent=11 // pred_check_branch
        %201 = sbr.rel (%p199) target = $region28
      $region27: #{upconv_block.2} parent=11 // pred_region
        _
      $region28: #{upconv_block.2} parent=11 // pred_fallthru
        _
    $region12: #{upconv_block.2} parent=5 // pred_fallthru
      _
    %p202 = scmp.lt.s32.totalorder %s13, 2
    // Predicated region
    $region29: #{upconv_block.2} parent=5 // pred_check
      %p203 = pneg %p202
    $region30: #{upconv_block.2} parent=5 // pred_check_branch
      %205 = sbr.rel (%p203) target = $region32
    $region31: #{upconv_block.2} parent=5 // pred_region
      // Predicated region
      $region33: #{upconv_block.2} parent=31 // pred_check
        %p206 = pneg %p54
      $region34: #{upconv_block.2} parent=31 // pred_check_branch
        %208 = sbr.rel (%p206) target = $region36
      $region35: #{upconv_block.2} parent=31 // pred_region
        %p209 = scmp.lt.s32.totalorder %s13, 1
        %s210 = scalar_select %p209, %s13, 1
        %s211 = smul.addr %s210, 2
        %s212 = smul.addr %s211, 8
        %s213 = scalar_lea.vmem %s1, %s212
      $region36: #{upconv_block.2} parent=31 // pred_fallthru
        _
    $region32: #{upconv_block.2} parent=5 // pred_fallthru
      _
    %p214 = scmp.le.s32.totalorder 1, %s13
    %p215 = scmp.lt.s32.totalorder %s13, 3
    %p216 = pnand %p214, %p215
    %p217 = pneg %p216
    // Predicated region
    $region37: #{upconv_block.2} parent=5 // pred_check
      _
    $region38: #{upconv_block.2} parent=5 // pred_check_branch
      %219 = sbr.rel (%p216) target = $region40
    $region39: #{upconv_block.2} parent=5 // pred_region
      %s220 = ssub.s32 %s13, 1
      %p221 = pneg %p34
      %p222 = pneg %p31
      %p223 = scmp.lt.s32.totalorder %s18, 1
      %s224 = scalar_select %p223, %s18, 1
      %s225 = smul.addr %s224, 2
      %s226 = smul.addr %s225, 8
      %s227 = scalar_lea.vmem %s1, %s226
      %p228 = pneg %p60
      %p229 = pneg %p57
      %p230 = pneg %p81
      %p231 = pneg %p78
      %p232 = pneg %p102
      %p233 = pneg %p99
      %p234 = pneg %p123
      %p235 = pneg %p120
      %p236 = pneg %p149
      %p237 = pneg %p146
      %p238 = scmp.lt.s32.totalorder %s18, 1
      %s239 = scalar_select %p238, %s18, 1
      %s240 = smul.addr %s239, 8
      %s241 = smul.addr %s240, 8
      %s242 = scalar_lea.vmem %s5, %s241
      %p243 = pneg %p175
      %p244 = pneg %p172
      %p245 = scmp.lt.s32.totalorder %s18, 1
      %s246 = scalar_select %p245, %s18, 1
      %s247 = smul.addr %s246, 2
      %s248 = scalar_lea.vmem %s6, %s247
      %p249 = scmp.lt.s32.totalorder %s18, 1
      %s250 = scalar_select %p249, %s18, 1
      %s251 = smul.addr %s250, 2
      %s252 = smul.addr %s251, 8
      %s253 = scalar_lea.vmem %s1, %s252
      %p254 = scmp.lt.s32.totalorder %s18, 1
      %s255 = scalar_select %p254, %s18, 1
      %s256 = smul.addr %s255, 8
      %s257 = smul.addr %s256, 8
      %s258 = scalar_lea.vmem %s5, %s257
      %p259 = scmp.lt.s32.totalorder %s18, 1
      %s260 = scalar_select %p259, %s18, 1
      %s261 = smul.addr %s260, 2
      %s262 = scalar_lea.vmem %s6, %s261
      %v263 = vld [vmem:[%s253] sm:$0xff]
      %v264 = vld [vmem:[%s253 + $0x8] sm:$0xff]
      %v265 = vld [vmem:[%s0] sm:$0xff]
      %v266 = vld [vmem:[%s0 + $0x8] sm:$0xff]
      %v267 = vld [vmem:[%s0 + $0x10] sm:$0xff]
      %v268 = vld [vmem:[%s0 + $0x18] sm:$0xff]
      %vm269 = vcmask 130048
      %v271 = vsel %vm269, %v265, 0
      %v274 = vsel %vm269, %v266, 0
      %v277 = vsel %vm269, %v267, 0
      %v280 = vsel %vm269, %v268, 0
      %282 = vmatprep.subr.mxu0 0.0
      %283 = vmatpush1.msra.mxu0 0.0
      %284 = vmatprep.subr.mxu0 0.0
      %285 = vmatpush1.msra.mxu0 0.0
      %286 = vmatprep.subr.mxu0 0.0
      %287 = vmatpush1.msra.mxu0 0.0
      %288 = vmatprep.subr.mxu0 0.0
      %289 = vmatpush1.msra.mxu0 0.0
      %290 = vmatprep.subr.mxu0 0.0
      %291 = vmatpush1.msra.mxu0 0.0
      %292 = vmatprep.subr.mxu0 0.0
      %293 = vmatpush1.msra.mxu0 0.0
      %294 = vmatprep.subr.mxu0 0.0
      %295 = vmatpush1.msra.mxu0 0.0
      %296 = vmatprep.subr.mxu0 0.0
      %297 = vmatpush1.msra.mxu0 0.0
      %298 = vmatprep.subr.mxu0 0.0
      %299 = vmatpush1.msra.mxu0 0.0
      %300 = vmatprep.subr.mxu0 0.0
      %301 = vmatpush1.msra.mxu0 0.0
      %302 = vmatprep.subr.mxu0 0.0
      %303 = vmatpush1.msra.mxu0 0.0
      %304 = vmatprep.subr.mxu0 0.0
      %305 = vmatpush1.msra.mxu0 0.0
      %306 = vmatprep.subr.mxu0 0.0
      %307 = vmatpush1.msra.mxu0 0.0
      %308 = vmatprep.subr.mxu0 0.0
      %309 = vmatpush1.msra.mxu0 0.0
      %310 = vmatprep.subr.mxu0 0.0
      %311 = vmatpush1.msra.mxu0 %v264
      %312 = vmatprep.subr.mxu0 0.0
      %313 = vmatpush1.msra.mxu0 %v263
      %314 = vmatprep.subr.mxu0 0.0
      %315 = vmatpush2.msra.mxu0 0.0
      %316 = vmatprep.subr.mxu0 0.0
      %317 = vmatpush2.msra.mxu0 0.0
      %318 = vmatprep.subr.mxu0 0.0
      %319 = vmatpush2.msra.mxu0 0.0
      %320 = vmatprep.subr.mxu0 0.0
      %321 = vmatpush2.msra.mxu0 0.0
      %322 = vmatprep.subr.mxu0 0.0
      %323 = vmatpush2.msra.mxu0 0.0
      %324 = vmatprep.subr.mxu0 0.0
      %325 = vmatpush2.msra.mxu0 0.0
      %326 = vmatprep.subr.mxu0 0.0
      %327 = vmatpush2.msra.mxu0 0.0
      %328 = vmatprep.subr.mxu0 0.0
      %329 = vmatpush2.msra.mxu0 0.0
      %330 = vmatprep.subr.mxu0 0.0
      %331 = vmatpush2.msra.mxu0 0.0
      %332 = vmatprep.subr.mxu0 0.0
      %333 = vmatpush2.msra.mxu0 0.0
      %334 = vmatprep.subr.mxu0 0.0
      %335 = vmatpush2.msra.mxu0 0.0
      %336 = vmatprep.subr.mxu0 0.0
      %337 = vmatpush2.msra.mxu0 0.0
      %338 = vmatprep.subr.mxu0 0.0
      %339 = vmatpush2.msra.mxu0 0.0
      %340 = vmatprep.subr.mxu0 0.0
      %341 = vmatpush2.msra.mxu0 0.0
      %342 = vmatprep.subr.mxu0 0.0
      %343 = vmatpush2.msra.mxu0 0.0
      %344 = vmatprep.subr.mxu0 0.0
      %345 = vmatpush2.msra.mxu0 0.0
      %346 = vmatprep.mubr.f32.mxu0 0.0
      %347 = vmatmul.mubr.f32.gmra.mxu0 %v271
      %v348 = vpop.f32.mrf.mxu0
      %v349 = vadd.f32 0.0, %v348
      %v350 = vpop.f32.mrf.mxu0
      %351 = vmatprep.mubr.f32.mxu0 0.0
      %352 = vmatmul.mubr.f32.gmra.mxu0 %v274
      %v353 = vpop.f32.mrf.mxu0
      %v354 = vadd.f32 0.0, %v353
      %v355 = vpop.f32.mrf.mxu0
      %356 = vmatprep.mubr.f32.mxu0 0.0
      %357 = vmatmul.mubr.f32.gmra.mxu0 %v277
      %v358 = vpop.f32.mrf.mxu0
      %v359 = vadd.f32 0.0, %v358
      %v360 = vpop.f32.mrf.mxu0
      %361 = vmatprep.mubr.f32.mxu0 0.0
      %362 = vmatmul.mubr.f32.gmra.mxu0 %v280
      %v363 = vpop.f32.mrf.mxu0
      %v364 = vadd.f32 0.0, %v363
      %v365 = vpop.f32.mrf.mxu0
      %366 = vdwg.mxu0
      %v367 = vld [vmem:[%s2] sm:$0xff]
      %v368 = vld [vmem:[%s2 + $0x8] sm:$0xff]
      %v369 = vld [vmem:[%s2 + $0x10] sm:$0xff]
      %v370 = vld [vmem:[%s2 + $0x18] sm:$0xff]
      %v371 = vld [vmem:[%s2 + $0x20] sm:$0xff]
      %v372 = vld [vmem:[%s2 + $0x28] sm:$0xff]
      %v373 = vld [vmem:[%s2 + $0x30] sm:$0xff]
      %v374 = vld [vmem:[%s2 + $0x38] sm:$0xff]
      %v375 = vld [vmem:[%s2 + $0x40] sm:$0xff]
      %v376 = vld [vmem:[%s2 + $0x48] sm:$0xff]
      %v377 = vld [vmem:[%s2 + $0x50] sm:$0xff]
      %v378 = vld [vmem:[%s2 + $0x58] sm:$0xff]
      %v379 = vld [vmem:[%s2 + $0x60] sm:$0xff]
      %v380 = vld [vmem:[%s2 + $0x68] sm:$0xff]
      %v381 = vld [vmem:[%s2 + $0x70] sm:$0xff]
      %v382 = vld [vmem:[%s2 + $0x78] sm:$0xff]
      %s383 = scalar_lea.vmem %s0, 32
      %v384 = vld [vmem:[%s383] sm:$0xff]
      %v385 = vld [vmem:[%s383 + $0x8] sm:$0xff]
      %v386 = vld [vmem:[%s383 + $0x10] sm:$0xff]
      %v387 = vld [vmem:[%s383 + $0x18] sm:$0xff]
      %v389 = vsel %vm269, %v384, 0
      %v392 = vsel %vm269, %v385, 0
      %v395 = vsel %vm269, %v386, 0
      %v398 = vsel %vm269, %v387, 0
      %400 = vmatprep.subr.mxu0 0.0
      %401 = vmatpush1.msra.mxu0 0.0
      %402 = vmatprep.subr.mxu0 0.0
      %403 = vmatpush1.msra.mxu0 0.0
      %404 = vmatprep.subr.mxu0 0.0
      %405 = vmatpush1.msra.mxu0 0.0
      %406 = vmatprep.subr.mxu0 0.0
      %407 = vmatpush1.msra.mxu0 0.0
      %408 = vmatprep.subr.mxu0 0.0
      %409 = vmatpush1.msra.mxu0 0.0
      %410 = vmatprep.subr.mxu0 0.0
      %411 = vmatpush1.msra.mxu0 0.0
      %412 = vmatprep.subr.mxu0 0.0
      %413 = vmatpush1.msra.mxu0 0.0
      %414 = vmatprep.subr.mxu0 0.0
      %415 = vmatpush1.msra.mxu0 0.0
      %416 = vmatprep.subr.mxu0 0.0
      %417 = vmatpush1.msra.mxu0 0.0
      %418 = vmatprep.subr.mxu0 0.0
      %419 = vmatpush1.msra.mxu0 0.0
      %420 = vmatprep.subr.mxu0 0.0
      %421 = vmatpush1.msra.mxu0 0.0
      %422 = vmatprep.subr.mxu0 0.0
      %423 = vmatpush1.msra.mxu0 0.0
      %424 = vmatprep.subr.mxu0 0.0
      %425 = vmatpush1.msra.mxu0 0.0
      %426 = vmatprep.subr.mxu0 0.0
      %427 = vmatpush1.msra.mxu0 0.0
      %428 = vmatprep.subr.mxu0 0.0
      %429 = vmatpush1.msra.mxu0 %v264
      %430 = vmatprep.subr.mxu0 0.0
      %431 = vmatpush1.msra.mxu0 %v263
      %432 = vmatprep.subr.mxu0 0.0
      %433 = vmatpush2.msra.mxu0 0.0
      %434 = vmatprep.subr.mxu0 0.0
      %435 = vmatpush2.msra.mxu0 0.0
      %436 = vmatprep.subr.mxu0 0.0
      %437 = vmatpush2.msra.mxu0 0.0
      %438 = vmatprep.subr.mxu0 0.0
      %439 = vmatpush2.msra.mxu0 0.0
      %440 = vmatprep.subr.mxu0 0.0
      %441 = vmatpush2.msra.mxu0 0.0
      %442 = vmatprep.subr.mxu0 0.0
      %443 = vmatpush2.msra.mxu0 0.0
      %444 = vmatprep.subr.mxu0 0.0
      %445 = vmatpush2.msra.mxu0 0.0
      %446 = vmatprep.subr.mxu0 0.0
      %447 = vmatpush2.msra.mxu0 0.0
      %448 = vmatprep.subr.mxu0 0.0
      %449 = vmatpush2.msra.mxu0 0.0
      %450 = vmatprep.subr.mxu0 0.0
      %451 = vmatpush2.msra.mxu0 0.0
      %452 = vmatprep.subr.mxu0 0.0
      %453 = vmatpush2.msra.mxu0 0.0
      %454 = vmatprep.subr.mxu0 0.0
      %455 = vmatpush2.msra.mxu0 0.0
      %456 = vmatprep.subr.mxu0 0.0
      %457 = vmatpush2.msra.mxu0 0.0
      %458 = vmatprep.subr.mxu0 0.0
      %459 = vmatpush2.msra.mxu0 0.0
      %460 = vmatprep.subr.mxu0 0.0
      %461 = vmatpush2.msra.mxu0 0.0
      %462 = vmatprep.subr.mxu0 0.0
      %463 = vmatpush2.msra.mxu0 0.0
      %464 = vmatprep.mubr.f32.mxu0 0.0
      %465 = vmatmul.mubr.f32.gmra.mxu0 %v389
      %v466 = vpop.f32.mrf.mxu0
      %v467 = vadd.f32 0.0, %v466
      %v468 = vpop.f32.mrf.mxu0
      %469 = vmatprep.mubr.f32.mxu0 0.0
      %470 = vmatmul.mubr.f32.gmra.mxu0 %v392
      %v471 = vpop.f32.mrf.mxu0
      %v472 = vadd.f32 0.0, %v471
      %v473 = vpop.f32.mrf.mxu0
      %474 = vmatprep.mubr.f32.mxu0 0.0
      %475 = vmatmul.mubr.f32.gmra.mxu0 %v395
      %v476 = vpop.f32.mrf.mxu0
      %v477 = vadd.f32 0.0, %v476
      %v478 = vpop.f32.mrf.mxu0
      %479 = vmatprep.mubr.f32.mxu0 0.0
      %480 = vmatmul.mubr.f32.gmra.mxu0 %v398
      %v481 = vpop.f32.mrf.mxu0
      %v482 = vadd.f32 0.0, %v481
      %v483 = vpop.f32.mrf.mxu0
      %484 = vdwg.mxu0
      %s485 = scalar_lea.vmem %s2, 128
      %v486 = vld [vmem:[%s485] sm:$0xff]
      %v487 = vld [vmem:[%s485 + $0x8] sm:$0xff]
      %v488 = vld [vmem:[%s485 + $0x10] sm:$0xff]
      %v489 = vld [vmem:[%s485 + $0x18] sm:$0xff]
      %v490 = vld [vmem:[%s485 + $0x20] sm:$0xff]
      %v491 = vld [vmem:[%s485 + $0x28] sm:$0xff]
      %v492 = vld [vmem:[%s485 + $0x30] sm:$0xff]
      %v493 = vld [vmem:[%s485 + $0x38] sm:$0xff]
      %v494 = vld [vmem:[%s485 + $0x40] sm:$0xff]
      %v495 = vld [vmem:[%s485 + $0x48] sm:$0xff]
      %v496 = vld [vmem:[%s485 + $0x50] sm:$0xff]
      %v497 = vld [vmem:[%s485 + $0x58] sm:$0xff]
      %v498 = vld [vmem:[%s485 + $0x60] sm:$0xff]
      %v499 = vld [vmem:[%s485 + $0x68] sm:$0xff]
      %v500 = vld [vmem:[%s485 + $0x70] sm:$0xff]
      %v501 = vld [vmem:[%s485 + $0x78] sm:$0xff]
      %vm502 = vcmask 523264
      %v504 = vsel %vm502, %v467, 0
      %v507 = vsel %vm502, %v472, 0
      %v510 = vsel %vm502, %v477, 0
      %v513 = vsel %vm502, %v482, 0
      %515 = vmatprep.subr.mxu0 0.0
      %516 = vmatpush1.msra.mxu0 0.0
      %517 = vmatprep.subr.mxu0 0.0
      %518 = vmatpush1.msra.mxu0 0.0
      %519 = vmatprep.subr.mxu0 0.0
      %520 = vmatpush1.msra.mxu0 0.0
      %521 = vmatprep.subr.mxu0 0.0
      %522 = vmatpush1.msra.mxu0 0.0
      %523 = vmatprep.subr.mxu0 0.0
      %524 = vmatpush1.msra.mxu0 0.0
      %525 = vmatprep.subr.mxu0 0.0
      %526 = vmatpush1.msra.mxu0 0.0
      %527 = vmatprep.subr.mxu0 0.0
      %528 = vmatpush1.msra.mxu0 0.0
      %529 = vmatprep.subr.mxu0 0.0
      %530 = vmatpush1.msra.mxu0 0.0
      %531 = vmatprep.subr.mxu0 %v501
      %532 = vmatpush1.msra.mxu0 %v500
      %533 = vmatprep.subr.mxu0 %v499
      %534 = vmatpush1.msra.mxu0 %v498
      %535 = vmatprep.subr.mxu0 %v497
      %536 = vmatpush1.msra.mxu0 %v496
      %537 = vmatprep.subr.mxu0 %v495
      %538 = vmatpush1.msra.mxu0 %v494
      %539 = vmatprep.subr.mxu0 %v493
      %540 = vmatpush1.msra.mxu0 %v492
      %541 = vmatprep.subr.mxu0 %v491
      %542 = vmatpush1.msra.mxu0 %v490
      %543 = vmatprep.subr.mxu0 %v489
      %544 = vmatpush1.msra.mxu0 %v488
      %545 = vmatprep.subr.mxu0 %v487
      %546 = vmatpush1.msra.mxu0 %v486
      %547 = vmatprep.subr.mxu0 0.0
      %548 = vmatpush2.msra.mxu0 0.0
      %549 = vmatprep.subr.mxu0 0.0
      %550 = vmatpush2.msra.mxu0 0.0
      %551 = vmatprep.subr.mxu0 0.0
      %552 = vmatpush2.msra.mxu0 0.0
      %553 = vmatprep.subr.mxu0 0.0
      %554 = vmatpush2.msra.mxu0 0.0
      %555 = vmatprep.subr.mxu0 0.0
      %556 = vmatpush2.msra.mxu0 0.0
      %557 = vmatprep.subr.mxu0 0.0
      %558 = vmatpush2.msra.mxu0 0.0
      %559 = vmatprep.subr.mxu0 0.0
      %560 = vmatpush2.msra.mxu0 0.0
      %561 = vmatprep.subr.mxu0 0.0
      %562 = vmatpush2.msra.mxu0 0.0
      %563 = vmatprep.subr.mxu0 0.0
      %564 = vmatpush2.msra.mxu0 0.0
      %565 = vmatprep.subr.mxu0 0.0
      %566 = vmatpush2.msra.mxu0 0.0
      %567 = vmatprep.subr.mxu0 0.0
      %568 = vmatpush2.msra.mxu0 0.0
      %569 = vmatprep.subr.mxu0 0.0
      %570 = vmatpush2.msra.mxu0 0.0
      %571 = vmatprep.subr.mxu0 0.0
      %572 = vmatpush2.msra.mxu0 0.0
      %573 = vmatprep.subr.mxu0 0.0
      %574 = vmatpush2.msra.mxu0 0.0
      %575 = vmatprep.subr.mxu0 0.0
      %576 = vmatpush2.msra.mxu0 0.0
      %577 = vmatprep.subr.mxu0 0.0
      %578 = vmatpush2.msra.mxu0 0.0
      %579 = vmatprep.mubr.f32.mxu0 0.0
      %580 = vmatmul.mubr.f32.gmra.mxu0 %v504
      %v581 = vpop.f32.mrf.mxu0
      %v582 = vadd.f32 0.0, %v581
      %v583 = vpop.f32.mrf.mxu0
      %v584 = vadd.f32 0.0, %v583
      %585 = vmatprep.mubr.f32.mxu0 0.0
      %586 = vmatmul.mubr.f32.gmra.mxu0 %v507
      %v587 = vpop.f32.mrf.mxu0
      %v588 = vadd.f32 0.0, %v587
      %v589 = vpop.f32.mrf.mxu0
      %v590 = vadd.f32 0.0, %v589
      %591 = vmatprep.mubr.f32.mxu0 0.0
      %592 = vmatmul.mubr.f32.gmra.mxu0 %v510
      %v593 = vpop.f32.mrf.mxu0
      %v594 = vadd.f32 0.0, %v593
      %v595 = vpop.f32.mrf.mxu0
      %v596 = vadd.f32 0.0, %v595
      %597 = vmatprep.mubr.f32.mxu0 0.0
      %598 = vmatmul.mubr.f32.gmra.mxu0 %v513
      %v599 = vpop.f32.mrf.mxu0
      %v600 = vadd.f32 0.0, %v599
      %v601 = vpop.f32.mrf.mxu0
      %v602 = vadd.f32 0.0, %v601
      %603 = vdwg.mxu0
      %v605 = vsel %vm502, %v349, 0
      %v608 = vsel %vm502, %v354, 0
      %v611 = vsel %vm502, %v359, 0
      %v614 = vsel %vm502, %v364, 0
      %616 = vmatprep.subr.mxu0 0.0
      %617 = vmatpush1.msra.mxu0 0.0
      %618 = vmatprep.subr.mxu0 0.0
      %619 = vmatpush1.msra.mxu0 0.0
      %620 = vmatprep.subr.mxu0 0.0
      %621 = vmatpush1.msra.mxu0 0.0
      %622 = vmatprep.subr.mxu0 0.0
      %623 = vmatpush1.msra.mxu0 0.0
      %624 = vmatprep.subr.mxu0 0.0
      %625 = vmatpush1.msra.mxu0 0.0
      %626 = vmatprep.subr.mxu0 0.0
      %627 = vmatpush1.msra.mxu0 0.0
      %628 = vmatprep.subr.mxu0 0.0
      %629 = vmatpush1.msra.mxu0 0.0
      %630 = vmatprep.subr.mxu0 0.0
      %631 = vmatpush1.msra.mxu0 0.0
      %632 = vmatprep.subr.mxu0 %v382
      %633 = vmatpush1.msra.mxu0 %v381
      %634 = vmatprep.subr.mxu0 %v380
      %635 = vmatpush1.msra.mxu0 %v379
      %636 = vmatprep.subr.mxu0 %v378
      %637 = vmatpush1.msra.mxu0 %v377
      %638 = vmatprep.subr.mxu0 %v376
      %639 = vmatpush1.msra.mxu0 %v375
      %640 = vmatprep.subr.mxu0 %v374
      %641 = vmatpush1.msra.mxu0 %v373
      %642 = vmatprep.subr.mxu0 %v372
      %643 = vmatpush1.msra.mxu0 %v371
      %644 = vmatprep.subr.mxu0 %v370
      %645 = vmatpush1.msra.mxu0 %v369
      %646 = vmatprep.subr.mxu0 %v368
      %647 = vmatpush1.msra.mxu0 %v367
      %648 = vmatprep.subr.mxu0 0.0
      %649 = vmatpush2.msra.mxu0 0.0
      %650 = vmatprep.subr.mxu0 0.0
      %651 = vmatpush2.msra.mxu0 0.0
      %652 = vmatprep.subr.mxu0 0.0
      %653 = vmatpush2.msra.mxu0 0.0
      %654 = vmatprep.subr.mxu0 0.0
      %655 = vmatpush2.msra.mxu0 0.0
      %656 = vmatprep.subr.mxu0 0.0
      %657 = vmatpush2.msra.mxu0 0.0
      %658 = vmatprep.subr.mxu0 0.0
      %659 = vmatpush2.msra.mxu0 0.0
      %660 = vmatprep.subr.mxu0 0.0
      %661 = vmatpush2.msra.mxu0 0.0
      %662 = vmatprep.subr.mxu0 0.0
      %663 = vmatpush2.msra.mxu0 0.0
      %664 = vmatprep.subr.mxu0 0.0
      %665 = vmatpush2.msra.mxu0 0.0
      %666 = vmatprep.subr.mxu0 0.0
      %667 = vmatpush2.msra.mxu0 0.0
      %668 = vmatprep.subr.mxu0 0.0
      %669 = vmatpush2.msra.mxu0 0.0
      %670 = vmatprep.subr.mxu0 0.0
      %671 = vmatpush2.msra.mxu0 0.0
      %672 = vmatprep.subr.mxu0 0.0
      %673 = vmatpush2.msra.mxu0 0.0
      %674 = vmatprep.subr.mxu0 0.0
      %675 = vmatpush2.msra.mxu0 0.0
      %676 = vmatprep.subr.mxu0 0.0
      %677 = vmatpush2.msra.mxu0 0.0
      %678 = vmatprep.subr.mxu0 0.0
      %679 = vmatpush2.msra.mxu0 0.0
      %680 = vmatprep.mubr.f32.mxu0 0.0
      %681 = vmatmul.mubr.f32.gmra.mxu0 %v605
      %v682 = vpop.f32.mrf.mxu0
      %v683 = vadd.f32 %v582, %v682
      %v684 = vpop.f32.mrf.mxu0
      %v685 = vadd.f32 %v584, %v684
      %686 = vmatprep.mubr.f32.mxu0 0.0
      %687 = vmatmul.mubr.f32.gmra.mxu0 %v608
      %v688 = vpop.f32.mrf.mxu0
      %v689 = vadd.f32 %v588, %v688
      %v690 = vpop.f32.mrf.mxu0
      %v691 = vadd.f32 %v590, %v690
      %692 = vmatprep.mubr.f32.mxu0 0.0
      %693 = vmatmul.mubr.f32.gmra.mxu0 %v611
      %v694 = vpop.f32.mrf.mxu0
      %v695 = vadd.f32 %v594, %v694
      %v696 = vpop.f32.mrf.mxu0
      %v697 = vadd.f32 %v596, %v696
      %698 = vmatprep.mubr.f32.mxu0 0.0
      %699 = vmatmul.mubr.f32.gmra.mxu0 %v614
      %v700 = vpop.f32.mrf.mxu0
      %v701 = vadd.f32 %v600, %v700
      %v702 = vpop.f32.mrf.mxu0
      %v703 = vadd.f32 %v602, %v702
      %704 = vdwg.mxu0
      %s705 = scalar_lea.vmem %s0, 64
      %v706 = vld [vmem:[%s705] sm:$0xff]
      %v707 = vld [vmem:[%s705 + $0x8] sm:$0xff]
      %v708 = vld [vmem:[%s705 + $0x10] sm:$0xff]
      %v709 = vld [vmem:[%s705 + $0x18] sm:$0xff]
      %v711 = vsel %vm269, %v706, 0
      %v714 = vsel %vm269, %v707, 0
      %v717 = vsel %vm269, %v708, 0
      %v720 = vsel %vm269, %v709, 0
      %722 = vmatprep.subr.mxu0 0.0
      %723 = vmatpush1.msra.mxu0 0.0
      %724 = vmatprep.subr.mxu0 0.0
      %725 = vmatpush1.msra.mxu0 0.0
      %726 = vmatprep.subr.mxu0 0.0
      %727 = vmatpush1.msra.mxu0 0.0
      %728 = vmatprep.subr.mxu0 0.0
      %729 = vmatpush1.msra.mxu0 0.0
      %730 = vmatprep.subr.mxu0 0.0
      %731 = vmatpush1.msra.mxu0 0.0
      %732 = vmatprep.subr.mxu0 0.0
      %733 = vmatpush1.msra.mxu0 0.0
      %734 = vmatprep.subr.mxu0 0.0
      %735 = vmatpush1.msra.mxu0 0.0
      %736 = vmatprep.subr.mxu0 0.0
      %737 = vmatpush1.msra.mxu0 0.0
      %738 = vmatprep.subr.mxu0 0.0
      %739 = vmatpush1.msra.mxu0 0.0
      %740 = vmatprep.subr.mxu0 0.0
      %741 = vmatpush1.msra.mxu0 0.0
      %742 = vmatprep.subr.mxu0 0.0
      %743 = vmatpush1.msra.mxu0 0.0
      %744 = vmatprep.subr.mxu0 0.0
      %745 = vmatpush1.msra.mxu0 0.0
      %746 = vmatprep.subr.mxu0 0.0
      %747 = vmatpush1.msra.mxu0 0.0
      %748 = vmatprep.subr.mxu0 0.0
      %749 = vmatpush1.msra.mxu0 0.0
      %750 = vmatprep.subr.mxu0 0.0
      %751 = vmatpush1.msra.mxu0 %v264
      %752 = vmatprep.subr.mxu0 0.0
      %753 = vmatpush1.msra.mxu0 %v263
      %754 = vmatprep.subr.mxu0 0.0
      %755 = vmatpush2.msra.mxu0 0.0
      %756 = vmatprep.subr.mxu0 0.0
      %757 = vmatpush2.msra.mxu0 0.0
      %758 = vmatprep.subr.mxu0 0.0
      %759 = vmatpush2.msra.mxu0 0.0
      %760 = vmatprep.subr.mxu0 0.0
      %761 = vmatpush2.msra.mxu0 0.0
      %762 = vmatprep.subr.mxu0 0.0
      %763 = vmatpush2.msra.mxu0 0.0
      %764 = vmatprep.subr.mxu0 0.0
      %765 = vmatpush2.msra.mxu0 0.0
      %766 = vmatprep.subr.mxu0 0.0
      %767 = vmatpush2.msra.mxu0 0.0
      %768 = vmatprep.subr.mxu0 0.0
      %769 = vmatpush2.msra.mxu0 0.0
      %770 = vmatprep.subr.mxu0 0.0
      %771 = vmatpush2.msra.mxu0 0.0
      %772 = vmatprep.subr.mxu0 0.0
      %773 = vmatpush2.msra.mxu0 0.0
      %774 = vmatprep.subr.mxu0 0.0
      %775 = vmatpush2.msra.mxu0 0.0
      %776 = vmatprep.subr.mxu0 0.0
      %777 = vmatpush2.msra.mxu0 0.0
      %778 = vmatprep.subr.mxu0 0.0
      %779 = vmatpush2.msra.mxu0 0.0
      %780 = vmatprep.subr.mxu0 0.0
      %781 = vmatpush2.msra.mxu0 0.0
      %782 = vmatprep.subr.mxu0 0.0
      %783 = vmatpush2.msra.mxu0 0.0
      %784 = vmatprep.subr.mxu0 0.0
      %785 = vmatpush2.msra.mxu0 0.0
      %786 = vmatprep.mubr.f32.mxu0 0.0
      %787 = vmatmul.mubr.f32.gmra.mxu0 %v711
      %v788 = vpop.f32.mrf.mxu0
      %v789 = vadd.f32 0.0, %v788
      %v790 = vpop.f32.mrf.mxu0
      %791 = vmatprep.mubr.f32.mxu0 0.0
      %792 = vmatmul.mubr.f32.gmra.mxu0 %v714
      %v793 = vpop.f32.mrf.mxu0
      %v794 = vadd.f32 0.0, %v793
      %v795 = vpop.f32.mrf.mxu0
      %796 = vmatprep.mubr.f32.mxu0 0.0
      %797 = vmatmul.mubr.f32.gmra.mxu0 %v717
      %v798 = vpop.f32.mrf.mxu0
      %v799 = vadd.f32 0.0, %v798
      %v800 = vpop.f32.mrf.mxu0
      %801 = vmatprep.mubr.f32.mxu0 0.0
      %802 = vmatmul.mubr.f32.gmra.mxu0 %v720
      %v803 = vpop.f32.mrf.mxu0
      %v804 = vadd.f32 0.0, %v803
      %v805 = vpop.f32.mrf.mxu0
      %806 = vdwg.mxu0
      %s807 = scalar_lea.vmem %s2, 256
      %v808 = vld [vmem:[%s807] sm:$0xff]
      %v809 = vld [vmem:[%s807 + $0x8] sm:$0xff]
      %v810 = vld [vmem:[%s807 + $0x10] sm:$0xff]
      %v811 = vld [vmem:[%s807 + $0x18] sm:$0xff]
      %v812 = vld [vmem:[%s807 + $0x20] sm:$0xff]
      %v813 = vld [vmem:[%s807 + $0x28] sm:$0xff]
      %v814 = vld [vmem:[%s807 + $0x30] sm:$0xff]
      %v815 = vld [vmem:[%s807 + $0x38] sm:$0xff]
      %v816 = vld [vmem:[%s807 + $0x40] sm:$0xff]
      %v817 = vld [vmem:[%s807 + $0x48] sm:$0xff]
      %v818 = vld [vmem:[%s807 + $0x50] sm:$0xff]
      %v819 = vld [vmem:[%s807 + $0x58] sm:$0xff]
      %v820 = vld [vmem:[%s807 + $0x60] sm:$0xff]
      %v821 = vld [vmem:[%s807 + $0x68] sm:$0xff]
      %v822 = vld [vmem:[%s807 + $0x70] sm:$0xff]
      %v823 = vld [vmem:[%s807 + $0x78] sm:$0xff]
      %v825 = vsel %vm502, %v789, 0
      %v828 = vsel %vm502, %v794, 0
      %v831 = vsel %vm502, %v799, 0
      %v834 = vsel %vm502, %v804, 0
      %836 = vmatprep.subr.mxu0 0.0
      %837 = vmatpush1.msra.mxu0 0.0
      %838 = vmatprep.subr.mxu0 0.0
      %839 = vmatpush1.msra.mxu0 0.0
      %840 = vmatprep.subr.mxu0 0.0
      %841 = vmatpush1.msra.mxu0 0.0
      %842 = vmatprep.subr.mxu0 0.0
      %843 = vmatpush1.msra.mxu0 0.0
      %844 = vmatprep.subr.mxu0 0.0
      %845 = vmatpush1.msra.mxu0 0.0
      %846 = vmatprep.subr.mxu0 0.0
      %847 = vmatpush1.msra.mxu0 0.0
      %848 = vmatprep.subr.mxu0 0.0
      %849 = vmatpush1.msra.mxu0 0.0
      %850 = vmatprep.subr.mxu0 0.0
      %851 = vmatpush1.msra.mxu0 0.0
      %852 = vmatprep.subr.mxu0 %v823
      %853 = vmatpush1.msra.mxu0 %v822
      %854 = vmatprep.subr.mxu0 %v821
      %855 = vmatpush1.msra.mxu0 %v820
      %856 = vmatprep.subr.mxu0 %v819
      %857 = vmatpush1.msra.mxu0 %v818
      %858 = vmatprep.subr.mxu0 %v817
      %859 = vmatpush1.msra.mxu0 %v816
      %860 = vmatprep.subr.mxu0 %v815
      %861 = vmatpush1.msra.mxu0 %v814
      %862 = vmatprep.subr.mxu0 %v813
      %863 = vmatpush1.msra.mxu0 %v812
      %864 = vmatprep.subr.mxu0 %v811
      %865 = vmatpush1.msra.mxu0 %v810
      %866 = vmatprep.subr.mxu0 %v809
      %867 = vmatpush1.msra.mxu0 %v808
      %868 = vmatprep.subr.mxu0 0.0
      %869 = vmatpush2.msra.mxu0 0.0
      %870 = vmatprep.subr.mxu0 0.0
      %871 = vmatpush2.msra.mxu0 0.0
      %872 = vmatprep.subr.mxu0 0.0
      %873 = vmatpush2.msra.mxu0 0.0
      %874 = vmatprep.subr.mxu0 0.0
      %875 = vmatpush2.msra.mxu0 0.0
      %876 = vmatprep.subr.mxu0 0.0
      %877 = vmatpush2.msra.mxu0 0.0
      %878 = vmatprep.subr.mxu0 0.0
      %879 = vmatpush2.msra.mxu0 0.0
      %880 = vmatprep.subr.mxu0 0.0
      %881 = vmatpush2.msra.mxu0 0.0
      %882 = vmatprep.subr.mxu0 0.0
      %883 = vmatpush2.msra.mxu0 0.0
      %884 = vmatprep.subr.mxu0 0.0
      %885 = vmatpush2.msra.mxu0 0.0
      %886 = vmatprep.subr.mxu0 0.0
      %887 = vmatpush2.msra.mxu0 0.0
      %888 = vmatprep.subr.mxu0 0.0
      %889 = vmatpush2.msra.mxu0 0.0
      %890 = vmatprep.subr.mxu0 0.0
      %891 = vmatpush2.msra.mxu0 0.0
      %892 = vmatprep.subr.mxu0 0.0
      %893 = vmatpush2.msra.mxu0 0.0
      %894 = vmatprep.subr.mxu0 0.0
      %895 = vmatpush2.msra.mxu0 0.0
      %896 = vmatprep.subr.mxu0 0.0
      %897 = vmatpush2.msra.mxu0 0.0
      %898 = vmatprep.subr.mxu0 0.0
      %899 = vmatpush2.msra.mxu0 0.0
      %900 = vmatprep.mubr.f32.mxu0 0.0
      %901 = vmatmul.mubr.f32.gmra.mxu0 %v825
      %v902 = vpop.f32.mrf.mxu0
      %v903 = vadd.f32 0.0, %v902
      %v904 = vpop.f32.mrf.mxu0
      %v905 = vadd.f32 0.0, %v904
      %906 = vmatprep.mubr.f32.mxu0 0.0
      %907 = vmatmul.mubr.f32.gmra.mxu0 %v828
      %v908 = vpop.f32.mrf.mxu0
      %v909 = vadd.f32 0.0, %v908
      %v910 = vpop.f32.mrf.mxu0
      %v911 = vadd.f32 0.0, %v910
      %912 = vmatprep.mubr.f32.mxu0 0.0
      %913 = vmatmul.mubr.f32.gmra.mxu0 %v831
      %v914 = vpop.f32.mrf.mxu0
      %v915 = vadd.f32 0.0, %v914
      %v916 = vpop.f32.mrf.mxu0
      %v917 = vadd.f32 0.0, %v916
      %918 = vmatprep.mubr.f32.mxu0 0.0
      %919 = vmatmul.mubr.f32.gmra.mxu0 %v834
      %v920 = vpop.f32.mrf.mxu0
      %v921 = vadd.f32 0.0, %v920
      %v922 = vpop.f32.mrf.mxu0
      %v923 = vadd.f32 0.0, %v922
      %924 = vdwg.mxu0
      %v925 = vadd.f32 %v683, %v903
      %v926 = vadd.f32 %v685, %v905
      %v927 = vadd.f32 %v689, %v909
      %v928 = vadd.f32 %v691, %v911
      %v929 = vadd.f32 %v695, %v915
      %v930 = vadd.f32 %v697, %v917
      %v931 = vadd.f32 %v701, %v921
      %v932 = vadd.f32 %v703, %v923
      %v933 = vld [vmem:[%s3] sm:$0x3]
      %v935 = vlaneseq
      %v936 = vshrl.u32 %v935, 7
      %v937 = vsub.s32 0, %v936
      %v938 = vrot.slane %v933, %v937
      %v939 = vlaneseq
      %v940 = vshrl.u32 %v939, 7
      %v941 = vsub.s32 1, %v940
      %v942 = vrot.slane %v933, %v941
      %v945 = vadd.f32 %v925, %v938
      %v946 = vadd.f32 %v926, %v942
      %v947 = vadd.f32 %v927, %v938
      %v948 = vadd.f32 %v928, %v942
      %v949 = vadd.f32 %v929, %v938
      %v950 = vadd.f32 %v930, %v942
      %v951 = vadd.f32 %v931, %v938
      %v952 = vadd.f32 %v932, %v942
      %953 = vst [vmem:[%s258] sm:$0xff] %v945
      %954 = vst [vmem:[%s258 + $0x8] sm:$0xff] %v946
      %955 = vst [vmem:[%s258 + $0x10] sm:$0xff] %v947
      %956 = vst [vmem:[%s258 + $0x18] sm:$0xff] %v948
      %957 = vst [vmem:[%s258 + $0x20] sm:$0xff] %v949
      %958 = vst [vmem:[%s258 + $0x28] sm:$0xff] %v950
      %959 = vst [vmem:[%s258 + $0x30] sm:$0xff] %v951
      %960 = vst [vmem:[%s258 + $0x38] sm:$0xff] %v952
      %v961 = vadd.f32 %v945, %v947
      %v962 = vadd.f32 %v961, %v949
      %v963 = vadd.f32 %v962, %v951
      %v964 = vrot.slane %v963, 4
      %v965 = vadd.f32 %v963, %v964
      %v966 = vrot.slane %v965, 2
      %v967 = vadd.f32 %v965, %v966
      %v968 = vrot.slane %v967, 1
      %v969 = vadd.f32 %v967, %v968
      %v970 = vadd.f32 %v946, %v948
      %v971 = vadd.f32 %v970, %v950
      %v972 = vadd.f32 %v971, %v952
      %v973 = vrot.slane %v972, 4
      %v974 = vadd.f32 %v972, %v973
      %v975 = vrot.slane %v974, 2
      %v976 = vadd.f32 %v974, %v975
      %v977 = vrot.slane %v976, 1
      %v978 = vadd.f32 %v976, %v977
      %v979 = vmul.f32 %v945, %v945
      %v980 = vmul.f32 %v946, %v946
      %v981 = vmul.f32 %v947, %v947
      %v982 = vmul.f32 %v948, %v948
      %v983 = vmul.f32 %v949, %v949
      %v984 = vmul.f32 %v950, %v950
      %v985 = vmul.f32 %v951, %v951
      %v986 = vmul.f32 %v952, %v952
      %v987 = vadd.f32 %v979, %v981
      %v988 = vadd.f32 %v987, %v983
      %v989 = vadd.f32 %v988, %v985
      %v990 = vrot.slane %v989, 4
      %v991 = vadd.f32 %v989, %v990
      %v992 = vrot.slane %v991, 2
      %v993 = vadd.f32 %v991, %v992
      %v994 = vrot.slane %v993, 1
      %v995 = vadd.f32 %v993, %v994
      %v996 = vadd.f32 %v980, %v982
      %v997 = vadd.f32 %v996, %v984
      %v998 = vadd.f32 %v997, %v986
      %v999 = vrot.slane %v998, 4
      %v1000 = vadd.f32 %v998, %v999
      %v1001 = vrot.slane %v1000, 2
      %v1002 = vadd.f32 %v1000, %v1001
      %v1003 = vrot.slane %v1002, 1
      %v1004 = vadd.f32 %v1002, %v1003
      %vm1005 = vcmask 1040384
      %v1006 = vsel %vm1005, %v969, %v995
      %v1007 = vsel %vm1005, %v978, %v1004
      %v1008 = vld [vmem:[%s4] sm:$0xff]
      %v1009 = vld [vmem:[%s4 + $0x8] sm:$0xff]
      %v1010 = vld [vmem:[%s4 + $0x10] sm:$0xff]
      %v1011 = vld [vmem:[%s4 + $0x18] sm:$0xff]
      %v1012 = vld [vmem:[%s4 + $0x20] sm:$0xff]
      %v1013 = vld [vmem:[%s4 + $0x28] sm:$0xff]
      %v1014 = vld [vmem:[%s4 + $0x30] sm:$0xff]
      %v1015 = vld [vmem:[%s4 + $0x38] sm:$0xff]
      %v1016 = vld [vmem:[%s4 + $0x40] sm:$0xff]
      %v1017 = vld [vmem:[%s4 + $0x48] sm:$0xff]
      %v1018 = vld [vmem:[%s4 + $0x50] sm:$0xff]
      %v1019 = vld [vmem:[%s4 + $0x58] sm:$0xff]
      %v1020 = vld [vmem:[%s4 + $0x60] sm:$0xff]
      %v1021 = vld [vmem:[%s4 + $0x68] sm:$0xff]
      %v1022 = vld [vmem:[%s4 + $0x70] sm:$0xff]
      %v1023 = vld [vmem:[%s4 + $0x78] sm:$0xff]
      %v1024 = vld [vmem:[%s4 + $0x80] sm:$0xff]
      %v1025 = vld [vmem:[%s4 + $0x88] sm:$0xff]
      %v1026 = vld [vmem:[%s4 + $0x90] sm:$0xff]
      %v1027 = vld [vmem:[%s4 + $0x98] sm:$0xff]
      %v1028 = vld [vmem:[%s4 + $0xa0] sm:$0xff]
      %v1029 = vld [vmem:[%s4 + $0xa8] sm:$0xff]
      %v1030 = vld [vmem:[%s4 + $0xb0] sm:$0xff]
      %v1031 = vld [vmem:[%s4 + $0xb8] sm:$0xff]
      %v1032 = vld [vmem:[%s4 + $0xc0] sm:$0xff]
      %v1033 = vld [vmem:[%s4 + $0xc8] sm:$0xff]
      %v1034 = vld [vmem:[%s4 + $0xd0] sm:$0xff]
      %v1035 = vld [vmem:[%s4 + $0xd8] sm:$0xff]
      %v1036 = vld [vmem:[%s4 + $0xe0] sm:$0xff]
      %v1037 = vld [vmem:[%s4 + $0xe8] sm:$0xff]
      %v1038 = vld [vmem:[%s4 + $0xf0] sm:$0xff]
      %v1039 = vld [vmem:[%s4 + $0xf8] sm:$0xff]
      %1040 = vmatprep.subr.mxu0 0.0
      %1041 = vmatpush1.msra.mxu0 %v1023
      %1042 = vmatprep.subr.mxu0 0.0
      %1043 = vmatpush1.msra.mxu0 %v1022
      %1044 = vmatprep.subr.mxu0 0.0
      %1045 = vmatpush1.msra.mxu0 %v1021
      %1046 = vmatprep.subr.mxu0 0.0
      %1047 = vmatpush1.msra.mxu0 %v1020
      %1048 = vmatprep.subr.mxu0 0.0
      %1049 = vmatpush1.msra.mxu0 %v1019
      %1050 = vmatprep.subr.mxu0 0.0
      %1051 = vmatpush1.msra.mxu0 %v1018
      %1052 = vmatprep.subr.mxu0 0.0
      %1053 = vmatpush1.msra.mxu0 %v1017
      %1054 = vmatprep.subr.mxu0 0.0
      %1055 = vmatpush1.msra.mxu0 %v1016
      %1056 = vmatprep.subr.mxu0 0.0
      %1057 = vmatpush1.msra.mxu0 %v1015
      %1058 = vmatprep.subr.mxu0 0.0
      %1059 = vmatpush1.msra.mxu0 %v1014
      %1060 = vmatprep.subr.mxu0 0.0
      %1061 = vmatpush1.msra.mxu0 %v1013
      %1062 = vmatprep.subr.mxu0 0.0
      %1063 = vmatpush1.msra.mxu0 %v1012
      %1064 = vmatprep.subr.mxu0 0.0
      %1065 = vmatpush1.msra.mxu0 %v1011
      %1066 = vmatprep.subr.mxu0 0.0
      %1067 = vmatpush1.msra.mxu0 %v1010
      %1068 = vmatprep.subr.mxu0 0.0
      %1069 = vmatpush1.msra.mxu0 %v1009
      %1070 = vmatprep.subr.mxu0 0.0
      %1071 = vmatpush1.msra.mxu0 %v1008
      %1072 = vmatprep.subr.mxu0 0.0
      %1073 = vmatpush2.msra.mxu0 %v1039
      %1074 = vmatprep.subr.mxu0 0.0
      %1075 = vmatpush2.msra.mxu0 %v1038
      %1076 = vmatprep.subr.mxu0 0.0
      %1077 = vmatpush2.msra.mxu0 %v1037
      %1078 = vmatprep.subr.mxu0 0.0
      %1079 = vmatpush2.msra.mxu0 %v1036
      %1080 = vmatprep.subr.mxu0 0.0
      %1081 = vmatpush2.msra.mxu0 %v1035
      %1082 = vmatprep.subr.mxu0 0.0
      %1083 = vmatpush2.msra.mxu0 %v1034
      %1084 = vmatprep.subr.mxu0 0.0
      %1085 = vmatpush2.msra.mxu0 %v1033
      %1086 = vmatprep.subr.mxu0 0.0
      %1087 = vmatpush2.msra.mxu0 %v1032
      %1088 = vmatprep.subr.mxu0 0.0
      %1089 = vmatpush2.msra.mxu0 %v1031
      %1090 = vmatprep.subr.mxu0 0.0
      %1091 = vmatpush2.msra.mxu0 %v1030
      %1092 = vmatprep.subr.mxu0 0.0
      %1093 = vmatpush2.msra.mxu0 %v1029
      %1094 = vmatprep.subr.mxu0 0.0
      %1095 = vmatpush2.msra.mxu0 %v1028
      %1096 = vmatprep.subr.mxu0 0.0
      %1097 = vmatpush2.msra.mxu0 %v1027
      %1098 = vmatprep.subr.mxu0 0.0
      %1099 = vmatpush2.msra.mxu0 %v1026
      %1100 = vmatprep.subr.mxu0 0.0
      %1101 = vmatpush2.msra.mxu0 %v1025
      %1102 = vmatprep.subr.mxu0 0.0
      %1103 = vmatpush2.msra.mxu0 %v1024
      %1104 = vmatprep.mubr.f32.mxu0 %v1007
      %1105 = vmatmul.mubr.f32.gmra.mxu0 %v1006
      %v1106 = vpop.f32.mrf.mxu0
      %v1107 = vadd.f32 0.0, %v1106
      %v1108 = vpop.f32.mrf.mxu0
      %1109 = vdwg.mxu0
      %vm1110 = vcmask 58368
      %1111 = vst.msk [vmem:[%s262] sm:$0x3] %vm1110, %v1107
      %p1112 = scmp.lt.s32.totalorder %s18, 1
      %s1113 = scalar_select %p1112, %s18, 1
      %s1114 = smul.addr %s1113, 8
      %s1115 = smul.addr %s1114, 8
      %s1116 = scalar_lea.vmem %s5, %s1115
      %p1117 = scmp.lt.s32.totalorder %s18, 1
      %s1118 = scalar_select %p1117, %s18, 1
      %s1119 = smul.addr %s1118, 2
      %s1120 = scalar_lea.vmem %s6, %s1119
      // Predicated region
      $region41: #{upconv_block.2} parent=39 // pred_check
        %p1121 = pneg %p146
      $region42: #{upconv_block.2} parent=39 // pred_check_branch
        %1123 = sbr.rel (%p1121) target = $region44
      $region43: #{upconv_block.2} parent=39 // pred_region
        _
      $region44: #{upconv_block.2} parent=39 // pred_fallthru
        _
      // Predicated region
      $region45: #{upconv_block.2} parent=39 // pred_check
        %p1124 = pneg %p172
      $region46: #{upconv_block.2} parent=39 // pred_check_branch
        %1126 = sbr.rel (%p1124) target = $region48
      $region47: #{upconv_block.2} parent=39 // pred_region
        _
      $region48: #{upconv_block.2} parent=39 // pred_fallthru
        _
    $region40: #{upconv_block.2} parent=5 // pred_fallthru
      _
    %p1127 = scmp.le.s32.totalorder 2, %s13
    // Predicated region
    $region49: #{upconv_block.2} parent=5 // pred_check
      %p1128 = pneg %p1127
    $region50: #{upconv_block.2} parent=5 // pred_check_branch
      %1130 = sbr.rel (%p1128) target = $region52
    $region51: #{upconv_block.2} parent=5 // pred_region
      %s1131 = ssub.s32 %s13, 2
      // Predicated region
      $region53: #{upconv_block.2} parent=51 // pred_check
        %p1132 = pneg %p152
      $region54: #{upconv_block.2} parent=51 // pred_check_branch
        %1134 = sbr.rel (%p1132) target = $region56
      $region55: #{upconv_block.2} parent=51 // pred_region
        %p1135 = scmp.lt.s32.totalorder %s19, 1
        %s1136 = scalar_select %p1135, %s19, 1
        %s1137 = smul.addr %s1136, 8
        %s1138 = smul.addr %s1137, 8
        %s1139 = scalar_lea.vmem %s5, %s1138
      $region56: #{upconv_block.2} parent=51 // pred_fallthru
        _
      // Predicated region
      $region57: #{upconv_block.2} parent=51 // pred_check
        %p1140 = pneg %p178
      $region58: #{upconv_block.2} parent=51 // pred_check_branch
        %1142 = sbr.rel (%p1140) target = $region60
      $region59: #{upconv_block.2} parent=51 // pred_region
        %p1143 = scmp.lt.s32.totalorder %s19, 1
        %s1144 = scalar_select %p1143, %s19, 1
        %s1145 = smul.addr %s1144, 2
        %s1146 = scalar_lea.vmem %s6, %s1145
      $region60: #{upconv_block.2} parent=51 // pred_fallthru
        _
    $region52: #{upconv_block.2} parent=5 // pred_fallthru
      _
  $region6: #{upconv_block.2} parent=0 // loop_footer
    %s17 = sadd.s32 1, %s13
  $region7: #{upconv_block.2} parent=0 // loop_footer_branch
    %12 = sbr.rel target = $region3
  $region8: #{upconv_block.2} parent=0 // loop_exit
    _

</llo_original>
